<compile_context>
chip_gen: v7x
topology: tpu7x:2x2x1
jax: 0.10.0
libtpu: 0.0.40
codegen_flags: <defaults>
</compile_context>

<pallas_src>
import functools

import jax
import jax.numpy as jnp
from jax.experimental import pallas as pl
from jax.experimental.pallas import tpu as pltpu


# ---------------------------------------------------------------------------
# Pallas kernel: one graph super-block (blk nodes, gpb graphs) per grid step.
# ---------------------------------------------------------------------------
def gcn_embed_block_kernel(x_ref, adj_ref, pool_ref, wf_ref, w1_ref, w2_ref,
                           node_ref, graph_ref):
    f32, bf16 = jnp.float32, jnp.bfloat16

    adj = adj_ref[0]                                     # (blk, blk) bf16, 0/1 exact

    # Fused emb_linear + layer-0 weight:  xw = X @ (W_emb @ W0)   (blk, 128) f32
    xw = jnp.dot(x_ref[...], wf_ref[...], preferred_element_type=f32)

    # GCN layer 0 (agg='sum', residual=False):  h = relu(A @ (X Wf))
    h = jnp.maximum(
        jnp.dot(adj, xw.astype(bf16), preferred_element_type=f32), 0.0)

    # GCN layer 1 (residual):  h = h + relu((A @ h) @ W1)
    agg = jnp.dot(adj, h.astype(bf16), preferred_element_type=f32)
    h = h + jnp.maximum(
        jnp.dot(agg.astype(bf16), w1_ref[...], preferred_element_type=f32), 0.0)

    # GCN layer 2 (residual):  h = h + relu((A @ h) @ W2)
    agg = jnp.dot(adj, h.astype(bf16), preferred_element_type=f32)
    h = h + jnp.maximum(
        jnp.dot(agg.astype(bf16), w2_ref[...], preferred_element_type=f32), 0.0)

    h_bf16 = h.astype(bf16)
    node_ref[...] = h_bf16                               # (blk, 128) bf16
    # SumPooling over the graphs of this super-block: (gpb, blk) @ (blk, 128)
    graph_ref[...] = jnp.dot(pool_ref[0], h_bf16, preferred_element_type=f32)


# ---------------------------------------------------------------------------
# Hot-path wrapper: inputs are already packed / padded / cast (done at init).
# ---------------------------------------------------------------------------
@functools.partial(jax.jit, static_argnames=("emb_size",))
def gcn_embed_mc_call(x_pad, adj_blk, pool_blk, wf_p, w1_p, w2_p, *, emb_size):
    num_blocks, blk, _ = adj_blk.shape
    gpb = pool_blk.shape[1]
    n_total, d_pad = x_pad.shape
    emb_pad = wf_p.shape[1]

    node_p, graph_p = pl.pallas_call(
        gcn_embed_block_kernel,
        grid=(num_blocks,),
        in_specs=[
            pl.BlockSpec((blk, d_pad), lambda i: (i, 0)),           # x (per block)
            pl.BlockSpec((1, blk, blk), lambda i: (i, 0, 0)),       # adjacency block
            pl.BlockSpec((1, gpb, blk), lambda i: (i, 0, 0)),       # pooling block
            pl.BlockSpec((d_pad, emb_pad), lambda i: (0, 0)),       # fused W (pinned)
            pl.BlockSpec((emb_pad, emb_pad), lambda i: (0, 0)),     # W1 (pinned)
            pl.BlockSpec((emb_pad, emb_pad), lambda i: (0, 0)),     # W2 (pinned)
        ],
        out_specs=(
            pl.BlockSpec((blk, emb_pad), lambda i: (i, 0)),         # emb_node (bf16)
            pl.BlockSpec((gpb, emb_pad), lambda i: (i, 0)),         # emb_graph (f32)
        ),
        out_shape=(
            jax.ShapeDtypeStruct((n_total, emb_pad), jnp.bfloat16),
            jax.ShapeDtypeStruct((num_blocks * gpb, emb_pad), jnp.float32),
        ),
        compiler_params=pltpu.CompilerParams(
            # Independent super-blocks: v7x's 2 TensorCores split the grid.
            dimension_semantics=("parallel",),
            # Explicit budget; per-step footprint is <1 MiB (double-buffered),
            # safely under v5e's 16 MiB scoped-VMEM default.
            vmem_limit_bytes=16 * 1024 * 1024,
        ),
    )(x_pad, adj_blk, pool_blk, wf_p, w1_p, w2_p)

    return node_p[:, :emb_size], graph_p[:, :emb_size]


# ---------------------------------------------------------------------------
# One-time init-side prep (hoisted out of the per-call hot path).
# ---------------------------------------------------------------------------
def _pad_to(a, shape):
    return jnp.pad(a, [(0, t - s) for s, t in zip(a.shape, shape)])


def prepare_weights(w_emb, w0, w1, w2, d_pad=128, emb_pad=128):
    # Exact algebraic fusion: no bias and no nonlinearity between emb_linear
    # and layer 0, so  relu(A @ (X W_emb) @ W0) == relu(A @ (X (W_emb W0))).
    w_fused = w_emb @ w0                                      # (d_n, emb_size) f32
    wf_p = _pad_to(w_fused, (d_pad, emb_pad)).astype(jnp.bfloat16)
    w1_p = _pad_to(w1, (emb_pad, emb_pad)).astype(jnp.bfloat16)
    w2_p = _pad_to(w2, (emb_pad, emb_pad)).astype(jnp.bfloat16)
    return wf_p, w1_p, w2_p


# ---------------------------------------------------------------------------
# Pure-JAX reference (mirrors the PyTorch forward exactly, eval mode, f32).
# ---------------------------------------------------------------------------
def gcn_embed_mc_ref(x, adj, pool, w_emb, w0, w1, w2):
    h = x @ w_emb
    h = jnp.maximum((adj @ h) @ w0, 0.0)
    h = h + jnp.maximum((adj @ h) @ w1, 0.0)
    h = h + jnp.maximum((adj @ h) @ w2, 0.0)
    return h, pool @ h


if __name__ == "__main__":
    # ----- module hyper-params (synthetic, deterministic) -------------------
    ATOM_VOCAB_LEN = 9                 # e.g. ['C','N','O','S','P','F','I','Cl','Br']
    d_n = ATOM_VOCAB_LEN + 18          # = 27  (len(ATOM_VOCAB) + 18)
    in_channels = 8
    args_emb_size = 16
    emb_size = args_emb_size * 2       # = 32
    D_PAD, EMB_PAD = 128, 128          # lane-dense feature padding

    # Super-block batching: 16 graphs x 16 nodes = 256 nodes per grid step,
    # 4 super-blocks -> 1024 nodes / 64 graphs per call.
    nodes_per_graph = 16
    graphs_per_block = 16
    num_blocks = 4
    block_nodes = graphs_per_block * nodes_per_graph        # 256
    total_graphs = num_blocks * graphs_per_block            # 64
    N = num_blocks * block_nodes                            # 1024

    key = jax.random.PRNGKey(0)
    k_x, k_adj, k_we, k_w0, k_w1, k_w2 = jax.random.split(key, 6)

    # node features (batched graph, N x d_n)
    x = jax.random.normal(k_x, (N, d_n), dtype=jnp.float32)

    # per-graph symmetric binary adjacency, no self-loops (== dgl.batch blocks)
    raw = jax.random.bernoulli(
        k_adj, 0.25, (total_graphs, nodes_per_graph, nodes_per_graph)
    ).astype(jnp.float32)
    adj_g = jnp.maximum(raw, jnp.swapaxes(raw, 1, 2)) * (1.0 - jnp.eye(nodes_per_graph))

    def block_diag(mats):              # (k, n, n) -> (k*n, k*n), host-side packing
        k, n = mats.shape[0], mats.shape[1]
        out = jnp.zeros((k * n, k * n), mats.dtype)
        for i in range(k):
            out = out.at[i * n:(i + 1) * n, i * n:(i + 1) * n].set(mats[i])
        return out

    # Kernel layout: adjacency kept as (G, blk, blk) block-diagonal tiles
    # (never a dense N x N matrix), 0/1 values exact in bf16.
    adj_blk = jnp.stack([
        block_diag(adj_g[b * graphs_per_block:(b + 1) * graphs_per_block])
        for b in range(num_blocks)
    ]).astype(jnp.bfloat16)                                  # (G, 256, 256)

    # SumPooling membership per super-block: (G, graphs_per_block, blk)
    pool_1 = jnp.kron(jnp.eye(graphs_per_block), jnp.ones((1, nodes_per_graph)))
    pool_blk = jnp.broadcast_to(
        pool_1, (num_blocks, graphs_per_block, block_nodes)).astype(jnp.bfloat16)

    # weights (nn.Linear(in, out, bias=False), stored pre-transposed as (in, out))
    def init_w(k, fan_in, fan_out):
        bound = 1.0 / jnp.sqrt(jnp.float32(fan_in))
        return jax.random.uniform(k, (fan_in, fan_out), jnp.float32, -bound, bound)

    w_emb = init_w(k_we, d_n, in_channels)         # emb_linear
    w0 = init_w(k_w0, in_channels, emb_size)       # gcn_layers[0]
    w1 = init_w(k_w1, emb_size, emb_size)          # gcn_layers[1]
    w2 = init_w(k_w2, emb_size, emb_size)          # gcn_layers[2]

    # ----- one-time prep (hoisted out of the per-call hot path) -------------
    wf_p, w1_p, w2_p = prepare_weights(w_emb, w0, w1, w2, D_PAD, EMB_PAD)
    x_pad = _pad_to(x, (N, D_PAD)).astype(jnp.bfloat16)

    # ----- run kernel --------------------------------------------------------
    emb_node, emb_graph = gcn_embed_mc_call(
        x_pad, adj_blk, pool_blk, wf_p, w1_p, w2_p, emb_size=emb_size)
    emb_node, emb_graph = jax.block_until_ready((emb_node, emb_graph))

    # ----- pure-f32 reference on the dense batched graph ---------------------
    adj_dense = block_diag(adj_blk.astype(jnp.float32))                # (N, N)
    pool_dense = jnp.kron(jnp.eye(total_graphs), jnp.ones((1, nodes_per_graph)))

    with jax.default_matmul_precision("highest"):
        ref_node, ref_graph = gcn_embed_mc_ref(
            x, adj_dense, pool_dense, w_emb, w0, w1, w2)

    # bf16 matmul operands (binary adj/pool exact; x/weights/h rounded to bf16,
    # f32 accumulate) -> compare at a few % of the output scale.
    def max_rel(a, b):
        a = a.astype(jnp.float32)
        return float(jnp.max(jnp.abs(a - b)) / (jnp.max(jnp.abs(b)) + 1e-6))

    assert max_rel(emb_node, ref_node) < 5e-2, max_rel(emb_node, ref_node)
    assert max_rel(emb_graph, ref_graph) < 5e-2, max_rel(emb_graph, ref_graph)

    # TODO(synk): dropout is treated as inference-mode identity (no RNG mask);
    # DGL graph batching / att_mask one-hot bookkeeping stays host-side metadata.
    print("KERNEL_OK")
</pallas_src>

<mosaic_0001>
module attributes {stable_mosaic.version = 11 : i64} {
  func.func @gcn_embed_block_kernel(%arg0: i32, %arg1: memref<256x128xbf16, #tpu.memory_space<vmem>>, %arg2: memref<1x256x256xbf16, #tpu.memory_space<vmem>>, %arg3: memref<1x16x256xbf16, #tpu.memory_space<vmem>>, %arg4: memref<128x128xbf16, #tpu.memory_space<vmem>>, %arg5: memref<128x128xbf16, #tpu.memory_space<vmem>>, %arg6: memref<128x128xbf16, #tpu.memory_space<vmem>>, %arg7: memref<256x128xbf16, #tpu.memory_space<vmem>>, %arg8: memref<16x128xf32, #tpu.memory_space<vmem>>) attributes {dimension_semantics = [#tpu.dimension_semantics<parallel>], iteration_bounds = array<i64: 4>, scalar_prefetch = 0 : i64, scratch_operands = 0 : i64, tpu.core_type = #tpu.core_type<tc>, window_params = [{transform_indices = @transform_0, window_bounds = array<i64: 256, 128>}, {transform_indices = @transform_1, window_bounds = array<i64: 1, 256, 256>}, {transform_indices = @transform_2, window_bounds = array<i64: 1, 16, 256>}, {pipeline_mode = #tpu.pipeline_mode<synchronous>, transform_indices = @transform_3, window_bounds = array<i64: 128, 128>}, {pipeline_mode = #tpu.pipeline_mode<synchronous>, transform_indices = @transform_4, window_bounds = array<i64: 128, 128>}, {pipeline_mode = #tpu.pipeline_mode<synchronous>, transform_indices = @transform_5, window_bounds = array<i64: 128, 128>}, {transform_indices = @transform_6, window_bounds = array<i64: 256, 128>}, {transform_indices = @transform_7, window_bounds = array<i64: 16, 128>}]} {
    %c0 = arith.constant 0 : index
    %c0_0 = arith.constant 0 : index
    %c0_1 = arith.constant 0 : index
    %0 = vector.load %arg2[%c0, %c0_0, %c0_1] : memref<1x256x256xbf16, #tpu.memory_space<vmem>>, vector<1x256x256xbf16>
    %1 = vector.shape_cast %0 : vector<1x256x256xbf16> to vector<256x256xbf16>
    %c0_2 = arith.constant 0 : index
    %c0_3 = arith.constant 0 : index
    %2 = vector.load %arg1[%c0_2, %c0_3] : memref<256x128xbf16, #tpu.memory_space<vmem>>, vector<256x128xbf16>
    %c0_4 = arith.constant 0 : index
    %c0_5 = arith.constant 0 : index
    %3 = vector.load %arg4[%c0_4, %c0_5] : memref<128x128xbf16, #tpu.memory_space<vmem>>, vector<128x128xbf16>
    %cst = arith.constant dense<0.000000e+00> : vector<256x128xf32>
    %4 = tpu.matmul %2, %3, %cst {dimension_numbers = #tpu.dot_dimension_numbers<[1], [0], [0], [1], [0, 0, 1, 1], [], []>} : vector<256x128xbf16>, vector<128x128xbf16>, vector<256x128xf32> -> vector<256x128xf32>
    %5 = arith.truncf %4 : vector<256x128xf32> to vector<256x128xbf16>
    %cst_6 = arith.constant dense<0.000000e+00> : vector<256x128xf32>
    %6 = tpu.matmul %1, %5, %cst_6 {dimension_numbers = #tpu.dot_dimension_numbers<[1], [0], [0], [1], [0, 0, 1, 1], [], []>} : vector<256x256xbf16>, vector<256x128xbf16>, vector<256x128xf32> -> vector<256x128xf32>
    %cst_7 = arith.constant 0.000000e+00 : f32
    %7 = vector.broadcast %cst_7 : f32 to vector<256x128xf32>
    %8 = arith.maximumf %6, %7 : vector<256x128xf32>
    %9 = arith.truncf %8 : vector<256x128xf32> to vector<256x128xbf16>
    %cst_8 = arith.constant dense<0.000000e+00> : vector<256x128xf32>
    %10 = tpu.matmul %1, %9, %cst_8 {dimension_numbers = #tpu.dot_dimension_numbers<[1], [0], [0], [1], [0, 0, 1, 1], [], []>} : vector<256x256xbf16>, vector<256x128xbf16>, vector<256x128xf32> -> vector<256x128xf32>
    %11 = arith.truncf %10 : vector<256x128xf32> to vector<256x128xbf16>
    %c0_9 = arith.constant 0 : index
    %c0_10 = arith.constant 0 : index
    %12 = vector.load %arg5[%c0_9, %c0_10] : memref<128x128xbf16, #tpu.memory_space<vmem>>, vector<128x128xbf16>
    %cst_11 = arith.constant dense<0.000000e+00> : vector<256x128xf32>
    %13 = tpu.matmul %11, %12, %cst_11 {dimension_numbers = #tpu.dot_dimension_numbers<[1], [0], [0], [1], [0, 0, 1, 1], [], []>} : vector<256x128xbf16>, vector<128x128xbf16>, vector<256x128xf32> -> vector<256x128xf32>
    %cst_12 = arith.constant 0.000000e+00 : f32
    %14 = vector.broadcast %cst_12 : f32 to vector<256x128xf32>
    %15 = arith.maximumf %13, %14 : vector<256x128xf32>
    %16 = arith.addf %8, %15 : vector<256x128xf32>
    %17 = arith.truncf %16 : vector<256x128xf32> to vector<256x128xbf16>
    %cst_13 = arith.constant dense<0.000000e+00> : vector<256x128xf32>
    %18 = tpu.matmul %1, %17, %cst_13 {dimension_numbers = #tpu.dot_dimension_numbers<[1], [0], [0], [1], [0, 0, 1, 1], [], []>} : vector<256x256xbf16>, vector<256x128xbf16>, vector<256x128xf32> -> vector<256x128xf32>
    %19 = arith.truncf %18 : vector<256x128xf32> to vector<256x128xbf16>
    %c0_14 = arith.constant 0 : index
    %c0_15 = arith.constant 0 : index
    %20 = vector.load %arg6[%c0_14, %c0_15] : memref<128x128xbf16, #tpu.memory_space<vmem>>, vector<128x128xbf16>
    %cst_16 = arith.constant dense<0.000000e+00> : vector<256x128xf32>
    %21 = tpu.matmul %19, %20, %cst_16 {dimension_numbers = #tpu.dot_dimension_numbers<[1], [0], [0], [1], [0, 0, 1, 1], [], []>} : vector<256x128xbf16>, vector<128x128xbf16>, vector<256x128xf32> -> vector<256x128xf32>
    %cst_17 = arith.constant 0.000000e+00 : f32
    %22 = vector.broadcast %cst_17 : f32 to vector<256x128xf32>
    %23 = arith.maximumf %21, %22 : vector<256x128xf32>
    %24 = arith.addf %16, %23 : vector<256x128xf32>
    %25 = arith.truncf %24 : vector<256x128xf32> to vector<256x128xbf16>
    %c0_18 = arith.constant 0 : index
    %c0_19 = arith.constant 0 : index
    %26 = vector.load %arg7[%c0_18, %c0_19] : memref<256x128xbf16, #tpu.memory_space<vmem>>, vector<256x128xbf16>
    tpu.vector_store %arg7[%c0_18, %c0_19], %25 {strides = array<i32>} : memref<256x128xbf16, #tpu.memory_space<vmem>>, vector<256x128xbf16>,
    %c0_20 = arith.constant 0 : index
    %c0_21 = arith.constant 0 : index
    %c0_22 = arith.constant 0 : index
    %27 = vector.load %arg3[%c0_20, %c0_21, %c0_22] : memref<1x16x256xbf16, #tpu.memory_space<vmem>>, vector<1x16x256xbf16>
    %28 = vector.shape_cast %27 : vector<1x16x256xbf16> to vector<16x256xbf16>
    %cst_23 = arith.constant dense<0.000000e+00> : vector<16x128xf32>
    %29 = tpu.matmul %28, %25, %cst_23 {dimension_numbers = #tpu.dot_dimension_numbers<[1], [0], [0], [1], [0, 0, 1, 1], [], []>} : vector<16x256xbf16>, vector<256x128xbf16>, vector<16x128xf32> -> vector<16x128xf32>
    %c0_24 = arith.constant 0 : index
    %c0_25 = arith.constant 0 : index
    %30 = vector.load %arg8[%c0_24, %c0_25] : memref<16x128xf32, #tpu.memory_space<vmem>>, vector<16x128xf32>
    tpu.vector_store %arg8[%c0_24, %c0_25], %29 {strides = array<i32>} : memref<16x128xf32, #tpu.memory_space<vmem>>, vector<16x128xf32>,
    return
  }
  func.func @transform_0(%arg0: i32) -> (i32, i32) {
    %c0_i32 = arith.constant 0 : i32
    %c0_i32_0 = arith.constant 0 : i32
    return %arg0, %c0_i32 : i32, i32
  }
  func.func @transform_1(%arg0: i32) -> (i32, i32, i32) {
    %c0_i32 = arith.constant 0 : i32
    %c0_i32_0 = arith.constant 0 : i32
    %c0_i32_1 = arith.constant 0 : i32
    return %arg0, %c0_i32, %c0_i32_0 : i32, i32, i32
  }
  func.func @transform_2(%arg0: i32) -> (i32, i32, i32) {
    %c0_i32 = arith.constant 0 : i32
    %c0_i32_0 = arith.constant 0 : i32
    %c0_i32_1 = arith.constant 0 : i32
    return %arg0, %c0_i32, %c0_i32_0 : i32, i32, i32
  }
  func.func @transform_3(%arg0: i32) -> (i32, i32) {
    %c0_i32 = arith.constant 0 : i32
    %c0_i32_0 = arith.constant 0 : i32
    %c0_i32_1 = arith.constant 0 : i32
    return %c0_i32, %c0_i32_0 : i32, i32
  }
  func.func @transform_4(%arg0: i32) -> (i32, i32) {
    %c0_i32 = arith.constant 0 : i32
    %c0_i32_0 = arith.constant 0 : i32
    %c0_i32_1 = arith.constant 0 : i32
    return %c0_i32, %c0_i32_0 : i32, i32
  }
  func.func @transform_5(%arg0: i32) -> (i32, i32) {
    %c0_i32 = arith.constant 0 : i32
    %c0_i32_0 = arith.constant 0 : i32
    %c0_i32_1 = arith.constant 0 : i32
    return %c0_i32, %c0_i32_0 : i32, i32
  }
  func.func @transform_6(%arg0: i32) -> (i32, i32) {
    %c0_i32 = arith.constant 0 : i32
    %c0_i32_0 = arith.constant 0 : i32
    return %arg0, %c0_i32 : i32, i32
  }
  func.func @transform_7(%arg0: i32) -> (i32, i32) {
    %c0_i32 = arith.constant 0 : i32
    %c0_i32_0 = arith.constant 0 : i32
    return %arg0, %c0_i32 : i32, i32
  }
}

</mosaic_0001>

<llo_original>
// kernel: gcn_embed_mc_call.1
$region0: #{gcn_embed_mc_call.1}
  #allocation0 [shape = 'u32[]', space=smem, size = 0x4, offset = 0x4, fixed_abs, tag = 'smem constant byte address 0x4 - core index']
  #allocation1 [shape = 'u32[144,128]{1,0:T(1,128)}', space=vmem, size = 0x12000, scoped, tag = 'internal scratch']
  %s0 = inlined_call_operand.hbm [shape: bf16[1024,128], index: 0, kind: input, shape index: {}]
  %s1 = inlined_call_operand.hbm [shape: bf16[4,256,256], index: 1, kind: input, shape index: {}]
  %s2 = inlined_call_operand.hbm [shape: bf16[4,16,256], index: 2, kind: input, shape index: {}]
  %s3 = inlined_call_operand.hbm [shape: bf16[128,128], index: 3, kind: input, shape index: {}]
  %s4 = inlined_call_operand.hbm [shape: bf16[128,128], index: 4, kind: input, shape index: {}]
  %s5 = inlined_call_operand.hbm [shape: bf16[128,128], index: 5, kind: input, shape index: {}]
  %s6 = inlined_call_operand.vmem [shape: bf16[1024,128], index: 6, kind: output, shape index: {0}]
  %s7 = inlined_call_operand.vmem [shape: f32[64,128], index: 7, kind: output, shape index: {1}]
  %8 = xla_tuple %s6, %s7
  %s9 = sld [smem:[#allocation0]]
  $region89: #{gcn_embed_mc_call.1} parent=0
    _
  %s11 = ssub.s32 1, %s9
  %s12 = scalar_select 0, %s11, %s9
  $region1: #{gcn_embed_mc_call.1} parent=0
    #allocation2 [shape = 'u8[131072]{0}', space=vmem, size = 0x20000, scoped, tag = 'input window, operand 0']
    #allocation3 [shape = 's32[2]{0}', space=sflag, size = 0x8, scoped, tag = 'scoped memory for gcn_embed_mc_call.1']
    #allocation4 [shape = 'u8[262144]{0}', space=vmem, size = 0x40000, scoped, tag = 'input window, operand 1']
    #allocation5 [shape = 's32[2]{0}', space=sflag, size = 0x8, scoped, tag = 'scoped memory for gcn_embed_mc_call.1']
    #allocation6 [shape = 'u8[16384]{0}', space=vmem, size = 0x4000, scoped, tag = 'input window, operand 2']
    #allocation7 [shape = 'u8[32768]{0}', space=vmem, size = 0x8000, scoped, tag = 'input window, operand 3, single buffered']
    #allocation8 [shape = 's32[1]{0}', space=sflag, size = 0x4, scoped, tag = 'scoped memory for gcn_embed_mc_call.1']
    #allocation9 [shape = 'u8[32768]{0}', space=vmem, size = 0x8000, scoped, tag = 'input window, operand 4, single buffered']
    #allocation10 [shape = 'u8[32768]{0}', space=vmem, size = 0x8000, scoped, tag = 'input window, operand 5, single buffered']
    #allocation11 [shape = 's32[1]{0}', space=sflag, size = 0x4, scoped, tag = 'scoped memory for gcn_embed_mc_call.1']
    %13 = vsyncpa [#allocation3], 0
    %s14 = scalar_lea.sflag [#allocation3], 1
    %15 = vsyncpa %s14, 0
    %16 = vsyncpa [#allocation5], 0
    %s17 = scalar_lea.sflag [#allocation5], 1
    %18 = vsyncpa %s17, 0
    %19 = vsyncpa [#allocation8], 0
    %20 = vsyncpa [#allocation11], 0
    loop: start=0, step=1, limit=6
    $region2: #{gcn_embed_mc_call.1} parent=1 // loop_pre_header
      _
    $region3: #{gcn_embed_mc_call.1} parent=1 // loop_header
      %s22 = sphi 0, %s26
      %p23 = scmp.ge.s32.totalorder %s22, 6
      %s32 = sphi 0, %s34
      %s35 = sphi 0, %s32
      %s36 = sphi 0, %s35
      %s52 = sphi 0, %s36
      %s58 = sphi 0, %s60
      %s61 = sphi 0, %s58
      %s62 = sphi 0, %s61
      %s78 = sphi 0, %s62
      %s84 = sphi 0, %s86
      %s87 = sphi 0, %s84
      %s88 = sphi 0, %s87
      %s104 = sphi 0, %s88
      %s108 = sphi 0, %s108
      %s110 = sphi 0, %s108
      %s111 = sphi 0, %s110
      %s125 = sphi 0, %s111
      %s129 = sphi 0, %s129
      %s131 = sphi 0, %s129
      %s132 = sphi 0, %s131
      %s146 = sphi 0, %s132
      %s150 = sphi 0, %s150
      %s152 = sphi 0, %s150
      %s153 = sphi 0, %s152
      %s167 = sphi 0, %s153
      %s173 = sphi 0, %s175
      %s176 = sphi 0, %s173
      %s177 = sphi 0, %s176
      %s193 = sphi 0, %s177
      %s199 = sphi 0, %s201
      %s202 = sphi 0, %s199
      %s203 = sphi 0, %s202
      %s219 = sphi 0, %s203
    $region4: #{gcn_embed_mc_call.1} parent=1 // loop_header_branch
      %25 = sbr.rel (%p23) target = $region8
    $region5: #{gcn_embed_mc_call.1} parent=1 // loop_body
      %s27 = ssub.s32 %s22, 1
      %s28 = ssub.s32 %s22, 2
      %s29 = sadd.s32 %s22, 1
      %s30 = ssub.s32 %s22, %s29
      %p31 = scmp.eq.s32.totalorder %s30, 0
      %s33 = sadd.s32 %s32, 1
      %s34 = scalar_select %p31, %s32, %s33
      %p37 = pneg %p31
      %p38 = scmp.eq.s32.totalorder %s22, 3
      %p39 = por %p37, %p38
      %p40 = scmp.ne.s32.totalorder %s32, %s35
      %p41 = scmp.eq.s32.totalorder %s22, 0
      %p42 = por %p40, %p41
      %p43 = scmp.ne.s32.totalorder %s32, %s35
      %p44 = scmp.eq.s32.totalorder %s27, 3
      %p45 = por %p43, %p44
      %p46 = scmp.ne.s32.totalorder %s35, %s36
      %p47 = scmp.eq.s32.totalorder %s27, 0
      %p48 = por %p46, %p47
      %p49 = scmp.ne.s32.totalorder %s35, %s36
      %p50 = scmp.eq.s32.totalorder %s28, 3
      %p51 = por %p49, %p50
      %p53 = scmp.ne.s32.totalorder %s36, %s52
      %p54 = scmp.eq.s32.totalorder %s28, 0
      %p55 = por %p53, %p54
      %s56 = ssub.s32 %s22, %s29
      %p57 = scmp.eq.s32.totalorder %s56, 0
      %s59 = sadd.s32 %s58, 1
      %s60 = scalar_select %p57, %s58, %s59
      %p63 = pneg %p57
      %p64 = scmp.eq.s32.totalorder %s22, 3
      %p65 = por %p63, %p64
      %p66 = scmp.ne.s32.totalorder %s58, %s61
      %p67 = scmp.eq.s32.totalorder %s22, 0
      %p68 = por %p66, %p67
      %p69 = scmp.ne.s32.totalorder %s58, %s61
      %p70 = scmp.eq.s32.totalorder %s27, 3
      %p71 = por %p69, %p70
      %p72 = scmp.ne.s32.totalorder %s61, %s62
      %p73 = scmp.eq.s32.totalorder %s27, 0
      %p74 = por %p72, %p73
      %p75 = scmp.ne.s32.totalorder %s61, %s62
      %p76 = scmp.eq.s32.totalorder %s28, 3
      %p77 = por %p75, %p76
      %p79 = scmp.ne.s32.totalorder %s62, %s78
      %p80 = scmp.eq.s32.totalorder %s28, 0
      %p81 = por %p79, %p80
      %s82 = ssub.s32 %s22, %s29
      %p83 = scmp.eq.s32.totalorder %s82, 0
      %s85 = sadd.s32 %s84, 1
      %s86 = scalar_select %p83, %s84, %s85
      %p89 = pneg %p83
      %p90 = scmp.eq.s32.totalorder %s22, 3
      %p91 = por %p89, %p90
      %p92 = scmp.ne.s32.totalorder %s84, %s87
      %p93 = scmp.eq.s32.totalorder %s22, 0
      %p94 = por %p92, %p93
      %p95 = scmp.ne.s32.totalorder %s84, %s87
      %p96 = scmp.eq.s32.totalorder %s27, 3
      %p97 = por %p95, %p96
      %p98 = scmp.ne.s32.totalorder %s87, %s88
      %p99 = scmp.eq.s32.totalorder %s27, 0
      %p100 = por %p98, %p99
      %p101 = scmp.ne.s32.totalorder %s87, %s88
      %p102 = scmp.eq.s32.totalorder %s28, 3
      %p103 = por %p101, %p102
      %p105 = scmp.ne.s32.totalorder %s88, %s104
      %p106 = scmp.eq.s32.totalorder %s28, 0
      %p107 = por %p105, %p106
      %s109 = sadd.s32 %s108, 1
      %p112 = scmp.eq.s32.totalorder %s22, 3
      %p113 = scmp.ne.s32.totalorder %s108, %s110
      %p114 = scmp.eq.s32.totalorder %s22, 0
      %p115 = por %p113, %p114
      %p116 = scmp.ne.s32.totalorder %s108, %s110
      %p117 = scmp.eq.s32.totalorder %s27, 3
      %p118 = por %p116, %p117
      %p119 = scmp.ne.s32.totalorder %s110, %s111
      %p120 = scmp.eq.s32.totalorder %s27, 0
      %p121 = por %p119, %p120
      %p122 = scmp.ne.s32.totalorder %s110, %s111
      %p123 = scmp.eq.s32.totalorder %s28, 3
      %p124 = por %p122, %p123
      %p126 = scmp.ne.s32.totalorder %s111, %s125
      %p127 = scmp.eq.s32.totalorder %s28, 0
      %p128 = por %p126, %p127
      %s130 = sadd.s32 %s129, 1
      %p133 = scmp.eq.s32.totalorder %s22, 3
      %p134 = scmp.ne.s32.totalorder %s129, %s131
      %p135 = scmp.eq.s32.totalorder %s22, 0
      %p136 = por %p134, %p135
      %p137 = scmp.ne.s32.totalorder %s129, %s131
      %p138 = scmp.eq.s32.totalorder %s27, 3
      %p139 = por %p137, %p138
      %p140 = scmp.ne.s32.totalorder %s131, %s132
      %p141 = scmp.eq.s32.totalorder %s27, 0
      %p142 = por %p140, %p141
      %p143 = scmp.ne.s32.totalorder %s131, %s132
      %p144 = scmp.eq.s32.totalorder %s28, 3
      %p145 = por %p143, %p144
      %p147 = scmp.ne.s32.totalorder %s132, %s146
      %p148 = scmp.eq.s32.totalorder %s28, 0
      %p149 = por %p147, %p148
      %s151 = sadd.s32 %s150, 1
      %p154 = scmp.eq.s32.totalorder %s22, 3
      %p155 = scmp.ne.s32.totalorder %s150, %s152
      %p156 = scmp.eq.s32.totalorder %s22, 0
      %p157 = por %p155, %p156
      %p158 = scmp.ne.s32.totalorder %s150, %s152
      %p159 = scmp.eq.s32.totalorder %s27, 3
      %p160 = por %p158, %p159
      %p161 = scmp.ne.s32.totalorder %s152, %s153
      %p162 = scmp.eq.s32.totalorder %s27, 0
      %p163 = por %p161, %p162
      %p164 = scmp.ne.s32.totalorder %s152, %s153
      %p165 = scmp.eq.s32.totalorder %s28, 3
      %p166 = por %p164, %p165
      %p168 = scmp.ne.s32.totalorder %s153, %s167
      %p169 = scmp.eq.s32.totalorder %s28, 0
      %p170 = por %p168, %p169
      %s171 = ssub.s32 %s22, %s29
      %p172 = scmp.eq.s32.totalorder %s171, 0
      %s174 = sadd.s32 %s173, 1
      %s175 = scalar_select %p172, %s173, %s174
      %p178 = pneg %p172
      %p179 = scmp.eq.s32.totalorder %s22, 3
      %p180 = por %p178, %p179
      %p181 = scmp.ne.s32.totalorder %s173, %s176
      %p182 = scmp.eq.s32.totalorder %s22, 0
      %p183 = por %p181, %p182
      %p184 = scmp.ne.s32.totalorder %s173, %s176
      %p185 = scmp.eq.s32.totalorder %s27, 3
      %p186 = por %p184, %p185
      %p187 = scmp.ne.s32.totalorder %s176, %s177
      %p188 = scmp.eq.s32.totalorder %s27, 0
      %p189 = por %p187, %p188
      %p190 = scmp.ne.s32.totalorder %s176, %s177
      %p191 = scmp.eq.s32.totalorder %s28, 3
      %p192 = por %p190, %p191
      %p194 = scmp.ne.s32.totalorder %s177, %s193
      %p195 = scmp.eq.s32.totalorder %s28, 0
      %p196 = por %p194, %p195
      %s197 = ssub.s32 %s22, %s29
      %p198 = scmp.eq.s32.totalorder %s197, 0
      %s200 = sadd.s32 %s199, 1
      %s201 = scalar_select %p198, %s199, %s200
      %p204 = pneg %p198
      %p205 = scmp.eq.s32.totalorder %s22, 3
      %p206 = por %p204, %p205
      %p207 = scmp.ne.s32.totalorder %s199, %s202
      %p208 = scmp.eq.s32.totalorder %s22, 0
      %p209 = por %p207, %p208
      %p210 = scmp.ne.s32.totalorder %s199, %s202
      %p211 = scmp.eq.s32.totalorder %s27, 3
      %p212 = por %p210, %p211
      %p213 = scmp.ne.s32.totalorder %s202, %s203
      %p214 = scmp.eq.s32.totalorder %s27, 0
      %p215 = por %p213, %p214
      %p216 = scmp.ne.s32.totalorder %s202, %s203
      %p217 = scmp.eq.s32.totalorder %s28, 3
      %p218 = por %p216, %p217
      %p220 = scmp.ne.s32.totalorder %s203, %s219
      %p221 = scmp.eq.s32.totalorder %s28, 0
      %p222 = por %p220, %p221
      %p223 = scmp.le.s32.totalorder 1, %s22
      %p224 = scmp.lt.s32.totalorder %s22, 5
      %p225 = pnand %p223, %p224
      %p226 = pneg %p225
      // Predicated region
      $region9: #{gcn_embed_mc_call.1} parent=5 // pred_check
        _
      $region10: #{gcn_embed_mc_call.1} parent=5 // pred_check_branch
        %228 = sbr.rel (%p225) target = $region12
      $region11: #{gcn_embed_mc_call.1} parent=5 // pred_region
        %s229 = ssub.s32 %s22, 1
        // Predicated region
        $region13: #{gcn_embed_mc_call.1} parent=11 // pred_check
          %p230 = pneg %p121
        $region14: #{gcn_embed_mc_call.1} parent=11 // pred_check_branch
          %232 = sbr.rel (%p230) target = $region16
        $region15: #{gcn_embed_mc_call.1} parent=11 // pred_region
          %s234 = ssub.s32 1024, 1024
          %235 = vsyncadd [#allocation8], %s234
          %s236 = sshll.u32 [#allocation7], 4
          %s237 = int_to_ptr.vmem [resolvable:$true] %s236
          %242 = dma.hbm_to_vmem [thread:$0]  %s3, 1024, %s237, [#allocation8], 64, 64, 4
        $region16: #{gcn_embed_mc_call.1} parent=11 // pred_fallthru
          _
        // Predicated region
        $region17: #{gcn_embed_mc_call.1} parent=11 // pred_check
          %p243 = pneg %p142
        $region18: #{gcn_embed_mc_call.1} parent=11 // pred_check_branch
          %245 = sbr.rel (%p243) target = $region20
        $region19: #{gcn_embed_mc_call.1} parent=11 // pred_region
          %s247 = ssub.s32 1024, 1024
          %248 = vsyncadd [#allocation8], %s247
          %s249 = sshll.u32 [#allocation9], 4
          %s250 = int_to_ptr.vmem [resolvable:$true] %s249
          %255 = dma.hbm_to_vmem [thread:$0]  %s4, 1024, %s250, [#allocation8], 64, 64, 4
        $region20: #{gcn_embed_mc_call.1} parent=11 // pred_fallthru
          _
        // Predicated region
        $region21: #{gcn_embed_mc_call.1} parent=11 // pred_check
          %p256 = pneg %p163
        $region22: #{gcn_embed_mc_call.1} parent=11 // pred_check_branch
          %258 = sbr.rel (%p256) target = $region24
        $region23: #{gcn_embed_mc_call.1} parent=11 // pred_region
          %s260 = ssub.s32 1024, 1024
          %261 = vsyncadd [#allocation11], %s260
          %s262 = sshll.u32 [#allocation10], 4
          %s263 = int_to_ptr.vmem [resolvable:$true] %s262
          %268 = dma.hbm_to_vmem [thread:$0]  %s5, 1024, %s263, [#allocation11], 64, 64, 4
        $region24: #{gcn_embed_mc_call.1} parent=11 // pred_fallthru
          _
      $region12: #{gcn_embed_mc_call.1} parent=5 // pred_fallthru
        _
      %p269 = scmp.lt.s32.totalorder %s22, 4
      // Predicated region
      $region25: #{gcn_embed_mc_call.1} parent=5 // pred_check
        %p270 = pneg %p269
      $region26: #{gcn_embed_mc_call.1} parent=5 // pred_check_branch
        %272 = sbr.rel (%p270) target = $region28
      $region27: #{gcn_embed_mc_call.1} parent=5 // pred_region
        // Predicated region
        $region29: #{gcn_embed_mc_call.1} parent=27 // pred_check
          %p273 = pneg %p42
        $region30: #{gcn_embed_mc_call.1} parent=27 // pred_check_branch
          %275 = sbr.rel (%p273) target = $region32
        $region31: #{gcn_embed_mc_call.1} parent=27 // pred_region
          %s276 = sand.u32 %s32, 1
          %s277 = scalar_lea.sflag [#allocation3], %s276
          %s278 = sand.u32 %s32, 1
          %s279 = smul.addr %s278, 128
          %s280 = scalar_lea.vmem [#allocation2], %s279
          %s281 = smul.u32 32, %s22
          %s283 = ssub.s32 2048, 2048
          %284 = vsyncadd %s277, %s283
          %s285 = smul.addr %s281, 64
          %s286 = scalar_lea.hbm %s0, %s285
          %s287 = sshll.u32 %s280, 4
          %s288 = int_to_ptr.vmem [resolvable:$true] %s287
          %293 = dma.hbm_to_vmem [thread:$0]  %s286, 2048, %s288, %s277, 64, 64, 4
        $region32: #{gcn_embed_mc_call.1} parent=27 // pred_fallthru
          _
        // Predicated region
        $region33: #{gcn_embed_mc_call.1} parent=27 // pred_check
          %p294 = pneg %p68
        $region34: #{gcn_embed_mc_call.1} parent=27 // pred_check_branch
          %296 = sbr.rel (%p294) target = $region36
        $region35: #{gcn_embed_mc_call.1} parent=27 // pred_region
          %s297 = sand.u32 %s22, 1
          %s298 = scalar_lea.sflag [#allocation5], %s297
          %s299 = sand.u32 %s58, 1
          %s300 = smul.addr %s299, 256
          %s301 = scalar_lea.vmem [#allocation4], %s300
          %s303 = ssub.s32 4096, 4096
          %304 = vsyncadd %s298, %s303
          %s305 = smul.addr %s22, 64
          %s306 = smul.addr %s305, 64
          %s307 = scalar_lea.hbm %s1, %s306
          %s308 = sshll.u32 %s301, 4
          %s309 = int_to_ptr.vmem [resolvable:$true] %s308
          %314 = dma.hbm_to_vmem [thread:$0]  %s307, 4096, %s309, %s298, 128, 128, 8
        $region36: #{gcn_embed_mc_call.1} parent=27 // pred_fallthru
          _
        // Predicated region
        $region37: #{gcn_embed_mc_call.1} parent=27 // pred_check
          %p315 = pneg %p94
        $region38: #{gcn_embed_mc_call.1} parent=27 // pred_check_branch
          %317 = sbr.rel (%p315) target = $region40
        $region39: #{gcn_embed_mc_call.1} parent=27 // pred_region
          %s318 = sand.u32 %s22, 1
          %s319 = scalar_lea.sflag [#allocation5], %s318
          %s320 = sand.u32 %s84, 1
          %s321 = smul.addr %s320, 16
          %s322 = scalar_lea.vmem [#allocation6], %s321
          %s324 = ssub.s32 256, 256
          %325 = vsyncadd %s319, %s324
          %s326 = smul.addr %s22, 4
          %s327 = smul.addr %s326, 64
          %s328 = scalar_lea.hbm %s2, %s327
          %s329 = sshll.u32 %s322, 4
          %s330 = int_to_ptr.vmem [resolvable:$true] %s329
          %335 = dma.hbm_to_vmem [thread:$0]  %s328, 256, %s330, %s319, 128, 128, 8
        $region40: #{gcn_embed_mc_call.1} parent=27 // pred_fallthru
          _
      $region28: #{gcn_embed_mc_call.1} parent=5 // pred_fallthru
        _
      %p336 = scmp.le.s32.totalorder 1, %s22
      %p337 = scmp.lt.s32.totalorder %s22, 5
      %p338 = pnand %p336, %p337
      %p339 = pneg %p338
      // Predicated region
      $region41: #{gcn_embed_mc_call.1} parent=5 // pred_check
        _
      $region42: #{gcn_embed_mc_call.1} parent=5 // pred_check_branch
        %341 = sbr.rel (%p338) target = $region44
      $region43: #{gcn_embed_mc_call.1} parent=5 // pred_region
        %s342 = ssub.s32 %s22, 1
        %s343 = sand.u32 %s35, 1
        %s344 = scalar_lea.sflag [#allocation3], %s343
        %s345 = sand.u32 %s35, 1
        %s346 = smul.addr %s345, 128
        %s347 = scalar_lea.vmem [#allocation2], %s346
        // Predicated region
        $region45: #{gcn_embed_mc_call.1} parent=43 // pred_check
          %p348 = pneg %p48
        $region46: #{gcn_embed_mc_call.1} parent=43 // pred_check_branch
          %350 = sbr.rel (%p348) target = $region48
        $region47: #{gcn_embed_mc_call.1} parent=43 // pred_region
          %351 = dma.done %s344, 2048
        $region48: #{gcn_embed_mc_call.1} parent=43 // pred_fallthru
          _
        %s352 = sand.u32 %s27, 1
        %s353 = scalar_lea.sflag [#allocation5], %s352
        %s354 = sand.u32 %s61, 1
        %s355 = smul.addr %s354, 256
        %s356 = scalar_lea.vmem [#allocation4], %s355
        // Predicated region
        $region49: #{gcn_embed_mc_call.1} parent=43 // pred_check
          %p357 = pneg %p74
        $region50: #{gcn_embed_mc_call.1} parent=43 // pred_check_branch
          %359 = sbr.rel (%p357) target = $region52
        $region51: #{gcn_embed_mc_call.1} parent=43 // pred_region
          %360 = dma.done %s353, 4096
        $region52: #{gcn_embed_mc_call.1} parent=43 // pred_fallthru
          _
        %s361 = sand.u32 %s27, 1
        %s362 = scalar_lea.sflag [#allocation5], %s361
        %s363 = sand.u32 %s87, 1
        %s364 = smul.addr %s363, 16
        %s365 = scalar_lea.vmem [#allocation6], %s364
        // Predicated region
        $region53: #{gcn_embed_mc_call.1} parent=43 // pred_check
          %p366 = pneg %p100
        $region54: #{gcn_embed_mc_call.1} parent=43 // pred_check_branch
          %368 = sbr.rel (%p366) target = $region56
        $region55: #{gcn_embed_mc_call.1} parent=43 // pred_region
          %369 = dma.done %s362, 256
        $region56: #{gcn_embed_mc_call.1} parent=43 // pred_fallthru
          _
        // Predicated region
        $region57: #{gcn_embed_mc_call.1} parent=43 // pred_check
          %p370 = pneg %p121
        $region58: #{gcn_embed_mc_call.1} parent=43 // pred_check_branch
          %372 = sbr.rel (%p370) target = $region60
        $region59: #{gcn_embed_mc_call.1} parent=43 // pred_region
          %373 = dma.done [#allocation8], 1024
        $region60: #{gcn_embed_mc_call.1} parent=43 // pred_fallthru
          _
        // Predicated region
        $region61: #{gcn_embed_mc_call.1} parent=43 // pred_check
          %p374 = pneg %p142
        $region62: #{gcn_embed_mc_call.1} parent=43 // pred_check_branch
          %376 = sbr.rel (%p374) target = $region64
        $region63: #{gcn_embed_mc_call.1} parent=43 // pred_region
          %377 = dma.done [#allocation8], 1024
        $region64: #{gcn_embed_mc_call.1} parent=43 // pred_fallthru
          _
        // Predicated region
        $region65: #{gcn_embed_mc_call.1} parent=43 // pred_check
          %p378 = pneg %p163
        $region66: #{gcn_embed_mc_call.1} parent=43 // pred_check_branch
          %380 = sbr.rel (%p378) target = $region68
        $region67: #{gcn_embed_mc_call.1} parent=43 // pred_region
          %381 = dma.done [#allocation11], 1024
        $region68: #{gcn_embed_mc_call.1} parent=43 // pred_fallthru
          _
        %s382 = sand.u32 %s35, 1
        %s383 = scalar_lea.sflag [#allocation3], %s382
        %s384 = sand.u32 %s35, 1
        %s385 = smul.addr %s384, 128
        %s386 = scalar_lea.vmem [#allocation2], %s385
        %p387 = pneg %p48
        %p388 = pneg %p45
        %s389 = sand.u32 %s27, 1
        %s390 = scalar_lea.sflag [#allocation5], %s389
        %s391 = sand.u32 %s61, 1
        %s392 = smul.addr %s391, 256
        %s393 = scalar_lea.vmem [#allocation4], %s392
        %p394 = pneg %p74
        %p395 = pneg %p71
        %s396 = sand.u32 %s27, 1
        %s397 = scalar_lea.sflag [#allocation5], %s396
        %s398 = sand.u32 %s87, 1
        %s399 = smul.addr %s398, 16
        %s400 = scalar_lea.vmem [#allocation6], %s399
        %p401 = pneg %p100
        %p402 = pneg %p97
        %p403 = pneg %p121
        %p404 = pneg %p118
        %p405 = pneg %p142
        %p406 = pneg %p139
        %p407 = pneg %p163
        %p408 = pneg %p160
        %p409 = pneg %p189
        %p410 = pneg %p186
        %s411 = smul.u32 32, %s27
        %p412 = scmp.lt.s32.totalorder %s411, 127
        %s413 = scalar_select %p412, %s411, 127
        %s414 = smul.addr %s413, 4
        %s415 = scalar_lea.vmem %s6, %s414
        %p416 = pneg %p215
        %p417 = pneg %p212
        %s418 = smul.u32 2, %s27
        %p419 = scmp.lt.s32.totalorder %s418, 7
        %s420 = scalar_select %p419, %s418, 7
        %s421 = smul.addr %s420, 8
        %s422 = scalar_lea.vmem %s7, %s421
        %s423 = smul.u32 32, %s27
        %s424 = smul.u32 32, %s27
        %p425 = scmp.lt.s32.totalorder %s424, 127
        %s426 = scalar_select %p425, %s424, 127
        %s427 = smul.addr %s426, 4
        %s428 = scalar_lea.vmem %s6, %s427
        %s429 = smul.u32 32, %s27
        %s430 = smul.u32 2, %s27
        %p431 = scmp.lt.s32.totalorder %s430, 7
        %s432 = scalar_select %p431, %s430, 7
        %s433 = smul.addr %s432, 8
        %s434 = scalar_lea.vmem %s7, %s433
        %s435 = smul.u32 2, %s27
        %v437 = vld [vmem:[%s356] sm:$0xff]
        %v438 = vld [vmem:[%s356 + $0x8] sm:$0xff]
        %v439 = vld [vmem:[%s356 + $0x10] sm:$0xff]
        %v440 = vld [vmem:[%s356 + $0x18] sm:$0xff]
        %v441 = vld [vmem:[%s356 + $0x20] sm:$0xff]
        %v442 = vld [vmem:[%s356 + $0x28] sm:$0xff]
        %v443 = vld [vmem:[%s356 + $0x30] sm:$0xff]
        %v444 = vld [vmem:[%s356 + $0x38] sm:$0xff]
        %v445 = vld [vmem:[%s356 + $0x40] sm:$0xff]
        %v446 = vld [vmem:[%s356 + $0x48] sm:$0xff]
        %v447 = vld [vmem:[%s356 + $0x50] sm:$0xff]
        %v448 = vld [vmem:[%s356 + $0x58] sm:$0xff]
        %v449 = vld [vmem:[%s356 + $0x60] sm:$0xff]
        %v450 = vld [vmem:[%s356 + $0x68] sm:$0xff]
        %v451 = vld [vmem:[%s356 + $0x70] sm:$0xff]
        %v452 = vld [vmem:[%s356 + $0x78] sm:$0xff]
        %v453 = vld [vmem:[%s356 + $0x80] sm:$0xff]
        %v454 = vld [vmem:[%s356 + $0x88] sm:$0xff]
        %v455 = vld [vmem:[%s356 + $0x90] sm:$0xff]
        %v456 = vld [vmem:[%s356 + $0x98] sm:$0xff]
        %v457 = vld [vmem:[%s356 + $0xa0] sm:$0xff]
        %v458 = vld [vmem:[%s356 + $0xa8] sm:$0xff]
        %v459 = vld [vmem:[%s356 + $0xb0] sm:$0xff]
        %v460 = vld [vmem:[%s356 + $0xb8] sm:$0xff]
        %v461 = vld [vmem:[%s356 + $0xc0] sm:$0xff]
        %v462 = vld [vmem:[%s356 + $0xc8] sm:$0xff]
        %v463 = vld [vmem:[%s356 + $0xd0] sm:$0xff]
        %v464 = vld [vmem:[%s356 + $0xd8] sm:$0xff]
        %v465 = vld [vmem:[%s356 + $0xe0] sm:$0xff]
        %v466 = vld [vmem:[%s356 + $0xe8] sm:$0xff]
        %v467 = vld [vmem:[%s356 + $0xf0] sm:$0xff]
        %v468 = vld [vmem:[%s356 + $0xf8] sm:$0xff]
        %v469 = vld [vmem:[%s347] sm:$0xf]
        %v470 = vld [vmem:[%s347 + $0x4] sm:$0xf]
        %v471 = vld [vmem:[%s347 + $0x8] sm:$0xf]
        %v472 = vld [vmem:[%s347 + $0xc] sm:$0xf]
        %v473 = vld [vmem:[%s347 + $0x10] sm:$0xf]
        %v474 = vld [vmem:[%s347 + $0x14] sm:$0xf]
        %v475 = vld [vmem:[%s347 + $0x18] sm:$0xf]
        %v476 = vld [vmem:[%s347 + $0x1c] sm:$0xf]
        %v477 = vld [vmem:[%s347 + $0x20] sm:$0xf]
        %v478 = vld [vmem:[%s347 + $0x24] sm:$0xf]
        %v479 = vld [vmem:[%s347 + $0x28] sm:$0xf]
        %v480 = vld [vmem:[%s347 + $0x2c] sm:$0xf]
        %v481 = vld [vmem:[%s347 + $0x30] sm:$0xf]
        %v482 = vld [vmem:[%s347 + $0x34] sm:$0xf]
        %v483 = vld [vmem:[%s347 + $0x38] sm:$0xf]
        %v484 = vld [vmem:[%s347 + $0x3c] sm:$0xf]
        %v485 = vld [vmem:[%s347 + $0x40] sm:$0xf]
        %v486 = vld [vmem:[%s347 + $0x44] sm:$0xf]
        %v487 = vld [vmem:[%s347 + $0x48] sm:$0xf]
        %v488 = vld [vmem:[%s347 + $0x4c] sm:$0xf]
        %v489 = vld [vmem:[%s347 + $0x50] sm:$0xf]
        %v490 = vld [vmem:[%s347 + $0x54] sm:$0xf]
        %v491 = vld [vmem:[%s347 + $0x58] sm:$0xf]
        %v492 = vld [vmem:[%s347 + $0x5c] sm:$0xf]
        %v493 = vld [vmem:[%s347 + $0x60] sm:$0xf]
        %v494 = vld [vmem:[%s347 + $0x64] sm:$0xf]
        %v495 = vld [vmem:[%s347 + $0x68] sm:$0xf]
        %v496 = vld [vmem:[%s347 + $0x6c] sm:$0xf]
        %v497 = vld [vmem:[%s347 + $0x70] sm:$0xf]
        %v498 = vld [vmem:[%s347 + $0x74] sm:$0xf]
        %v499 = vld [vmem:[%s347 + $0x78] sm:$0xf]
        %v500 = vld [vmem:[%s347 + $0x7c] sm:$0xf]
        %v501 = vld [vmem:[#allocation7] sm:$0xf]
        %v502 = vld [vmem:[#allocation7 + $0x4] sm:$0xf]
        %v503 = vld [vmem:[#allocation7 + $0x8] sm:$0xf]
        %v504 = vld [vmem:[#allocation7 + $0xc] sm:$0xf]
        %v505 = vld [vmem:[#allocation7 + $0x10] sm:$0xf]
        %v506 = vld [vmem:[#allocation7 + $0x14] sm:$0xf]
        %v507 = vld [vmem:[#allocation7 + $0x18] sm:$0xf]
        %v508 = vld [vmem:[#allocation7 + $0x1c] sm:$0xf]
        %v509 = vld [vmem:[#allocation7 + $0x20] sm:$0xf]
        %v510 = vld [vmem:[#allocation7 + $0x24] sm:$0xf]
        %v511 = vld [vmem:[#allocation7 + $0x28] sm:$0xf]
        %v512 = vld [vmem:[#allocation7 + $0x2c] sm:$0xf]
        %v513 = vld [vmem:[#allocation7 + $0x30] sm:$0xf]
        %v514 = vld [vmem:[#allocation7 + $0x34] sm:$0xf]
        %v515 = vld [vmem:[#allocation7 + $0x38] sm:$0xf]
        %v516 = vld [vmem:[#allocation7 + $0x3c] sm:$0xf]
        %v549 = vunpack.c.l.b16 %v469
        %v550 = vunpack.c.l.b16 %v470
        %v551 = vunpack.c.l.b16 %v471
        %v552 = vunpack.c.l.b16 %v472
        %v553 = vunpack.c.l.b16 %v473
        %v554 = vunpack.c.l.b16 %v474
        %v555 = vunpack.c.l.b16 %v475
        %v556 = vunpack.c.l.b16 %v476
        %v557 = vunpack.c.l.b16 %v477
        %v558 = vunpack.c.l.b16 %v478
        %v559 = vunpack.c.l.b16 %v479
        %v560 = vunpack.c.l.b16 %v480
        %v561 = vunpack.c.l.b16 %v481
        %v562 = vunpack.c.l.b16 %v482
        %v563 = vunpack.c.l.b16 %v483
        %v564 = vunpack.c.l.b16 %v484
        %v565 = vunpack.c.l.b16 %v485
        %v566 = vunpack.c.l.b16 %v486
        %v567 = vunpack.c.l.b16 %v487
        %v568 = vunpack.c.l.b16 %v488
        %v569 = vunpack.c.l.b16 %v489
        %v570 = vunpack.c.l.b16 %v490
        %v571 = vunpack.c.l.b16 %v491
        %v572 = vunpack.c.l.b16 %v492
        %v573 = vunpack.c.l.b16 %v493
        %v574 = vunpack.c.l.b16 %v494
        %v575 = vunpack.c.l.b16 %v495
        %v576 = vunpack.c.l.b16 %v496
        %v577 = vunpack.c.l.b16 %v497
        %v578 = vunpack.c.l.b16 %v498
        %v579 = vunpack.c.l.b16 %v499
        %v580 = vunpack.c.l.b16 %v500
        %v581 = vpack.c.b16 %v550, %v549
        %v582 = vpack.c.b16 %v552, %v551
        %v583 = vpack.c.b16 %v554, %v553
        %v584 = vpack.c.b16 %v556, %v555
        %v585 = vpack.c.b16 %v558, %v557
        %v586 = vpack.c.b16 %v560, %v559
        %v587 = vpack.c.b16 %v562, %v561
        %v588 = vpack.c.b16 %v564, %v563
        %v589 = vpack.c.b16 %v566, %v565
        %v590 = vpack.c.b16 %v568, %v567
        %v591 = vpack.c.b16 %v570, %v569
        %v592 = vpack.c.b16 %v572, %v571
        %v593 = vpack.c.b16 %v574, %v573
        %v594 = vpack.c.b16 %v576, %v575
        %v595 = vpack.c.b16 %v578, %v577
        %v596 = vpack.c.b16 %v580, %v579
        %v629 = vunpack.c.l.b16 %v501
        %v630 = vunpack.c.l.b16 %v502
        %v631 = vunpack.c.l.b16 %v503
        %v632 = vunpack.c.l.b16 %v504
        %v633 = vunpack.c.l.b16 %v505
        %v634 = vunpack.c.l.b16 %v506
        %v635 = vunpack.c.l.b16 %v507
        %v636 = vunpack.c.l.b16 %v508
        %v637 = vunpack.c.l.b16 %v509
        %v638 = vunpack.c.l.b16 %v510
        %v639 = vunpack.c.l.b16 %v511
        %v640 = vunpack.c.l.b16 %v512
        %v641 = vunpack.c.l.b16 %v513
        %v642 = vunpack.c.l.b16 %v514
        %v643 = vunpack.c.l.b16 %v515
        %v644 = vunpack.c.l.b16 %v516
        %v645 = vpack.c.b16 %v630, %v629
        %v646 = vpack.c.b16 %v632, %v631
        %v647 = vpack.c.b16 %v634, %v633
        %v648 = vpack.c.b16 %v636, %v635
        %v649 = vpack.c.b16 %v638, %v637
        %v650 = vpack.c.b16 %v640, %v639
        %v651 = vpack.c.b16 %v642, %v641
        %v652 = vpack.c.b16 %v644, %v643
        %661 = vmatprep.subr.bf16.mxu0 0
        %662 = vmatpush1.bf16.msra.mxu0 %v645
        %663 = vmatprep.subr.bf16.mxu0 0
        %664 = vmatpush1.bf16.msra.mxu0 %v646
        %665 = vmatprep.subr.bf16.mxu0 0
        %666 = vmatpush1.bf16.msra.mxu0 %v647
        %667 = vmatprep.subr.bf16.mxu0 0
        %668 = vmatpush1.bf16.msra.mxu0 %v648
        %669 = vmatprep.subr.bf16.mxu0 0
        %670 = vmatpush1.bf16.msra.mxu0 %v649
        %671 = vmatprep.subr.bf16.mxu0 0
        %672 = vmatpush1.bf16.msra.mxu0 %v650
        %673 = vmatprep.subr.bf16.mxu0 0
        %674 = vmatpush1.bf16.msra.mxu0 %v651
        %675 = vmatprep.subr.bf16.mxu0 0
        %676 = vmatpush1.bf16.msra.mxu0 %v652
        %677 = vmatprep.subr.bf16.mxu0 0
        %678 = vmatpush1.bf16.msra.mxu0 0
        %679 = vmatprep.subr.bf16.mxu0 0
        %680 = vmatpush1.bf16.msra.mxu0 0
        %681 = vmatprep.subr.bf16.mxu0 0
        %682 = vmatpush1.bf16.msra.mxu0 0
        %683 = vmatprep.subr.bf16.mxu0 0
        %684 = vmatpush1.bf16.msra.mxu0 0
        %685 = vmatprep.subr.bf16.mxu0 0
        %686 = vmatpush1.bf16.msra.mxu0 0
        %687 = vmatprep.subr.bf16.mxu0 0
        %688 = vmatpush1.bf16.msra.mxu0 0
        %689 = vmatprep.subr.bf16.mxu0 0
        %690 = vmatpush1.bf16.msra.mxu0 0
        %691 = vmatprep.subr.bf16.mxu0 0
        %692 = vmatpush1.bf16.msra.mxu0 0
        %693 = vmatprep.mubr.bf16.mxu0 0
        %694 = vmatmul.mubr.bf16.gmra.mrb[0].mxu0 %v581
        %v695 = vpop.f32.mrb[0].mxu0
        %v696 = vadd.f32 0.0, %v695
        %v697 = vpop.f32.mrb[0].mxu0
        %v698 = vpop.f32.mrb[0].mxu0
        %v699 = vadd.f32 0.0, %v698
        %v700 = vpop.f32.mrb[0].mxu0
        %701 = vmatprep.mubr.bf16.mxu0 0
        %702 = vmatmul.mubr.bf16.gmra.mrb[0].mxu0 %v582
        %v703 = vpop.f32.mrb[0].mxu0
        %v704 = vadd.f32 0.0, %v703
        %v705 = vpop.f32.mrb[0].mxu0
        %v706 = vpop.f32.mrb[0].mxu0
        %v707 = vadd.f32 0.0, %v706
        %v708 = vpop.f32.mrb[0].mxu0
        %709 = vmatprep.mubr.bf16.mxu0 0
        %710 = vmatmul.mubr.bf16.gmra.mrb[0].mxu0 %v583
        %v711 = vpop.f32.mrb[0].mxu0
        %v712 = vadd.f32 0.0, %v711
        %v713 = vpop.f32.mrb[0].mxu0
        %v714 = vpop.f32.mrb[0].mxu0
        %v715 = vadd.f32 0.0, %v714
        %v716 = vpop.f32.mrb[0].mxu0
        %717 = vmatprep.mubr.bf16.mxu0 0
        %718 = vmatmul.mubr.bf16.gmra.mrb[0].mxu0 %v584
        %v719 = vpop.f32.mrb[0].mxu0
        %v720 = vadd.f32 0.0, %v719
        %v721 = vpop.f32.mrb[0].mxu0
        %v722 = vpop.f32.mrb[0].mxu0
        %v723 = vadd.f32 0.0, %v722
        %v724 = vpop.f32.mrb[0].mxu0
        %725 = vmatprep.mubr.bf16.mxu0 0
        %726 = vmatmul.mubr.bf16.gmra.mrb[0].mxu0 %v585
        %v727 = vpop.f32.mrb[0].mxu0
        %v728 = vadd.f32 0.0, %v727
        %v729 = vpop.f32.mrb[0].mxu0
        %v730 = vpop.f32.mrb[0].mxu0
        %v731 = vadd.f32 0.0, %v730
        %v732 = vpop.f32.mrb[0].mxu0
        %733 = vmatprep.mubr.bf16.mxu0 0
        %734 = vmatmul.mubr.bf16.gmra.mrb[0].mxu0 %v586
        %v735 = vpop.f32.mrb[0].mxu0
        %v736 = vadd.f32 0.0, %v735
        %v737 = vpop.f32.mrb[0].mxu0
        %v738 = vpop.f32.mrb[0].mxu0
        %v739 = vadd.f32 0.0, %v738
        %v740 = vpop.f32.mrb[0].mxu0
        %741 = vmatprep.mubr.bf16.mxu0 0
        %742 = vmatmul.mubr.bf16.gmra.mrb[0].mxu0 %v587
        %v743 = vpop.f32.mrb[0].mxu0
        %v744 = vadd.f32 0.0, %v743
        %v745 = vpop.f32.mrb[0].mxu0
        %v746 = vpop.f32.mrb[0].mxu0
        %v747 = vadd.f32 0.0, %v746
        %v748 = vpop.f32.mrb[0].mxu0
        %749 = vmatprep.mubr.bf16.mxu0 0
        %750 = vmatmul.mubr.bf16.gmra.mrb[0].mxu0 %v588
        %v751 = vpop.f32.mrb[0].mxu0
        %v752 = vadd.f32 0.0, %v751
        %v753 = vpop.f32.mrb[0].mxu0
        %v754 = vpop.f32.mrb[0].mxu0
        %v755 = vadd.f32 0.0, %v754
        %v756 = vpop.f32.mrb[0].mxu0
        %757 = vmatprep.mubr.bf16.mxu0 0
        %758 = vmatmul.mubr.bf16.gmra.mrb[0].mxu0 %v589
        %v759 = vpop.f32.mrb[0].mxu0
        %v760 = vadd.f32 0.0, %v759
        %v761 = vpop.f32.mrb[0].mxu0
        %v762 = vpop.f32.mrb[0].mxu0
        %v763 = vadd.f32 0.0, %v762
        %v764 = vpop.f32.mrb[0].mxu0
        %765 = vmatprep.mubr.bf16.mxu0 0
        %766 = vmatmul.mubr.bf16.gmra.mrb[0].mxu0 %v590
        %v767 = vpop.f32.mrb[0].mxu0
        %v768 = vadd.f32 0.0, %v767
        %v769 = vpop.f32.mrb[0].mxu0
        %v770 = vpop.f32.mrb[0].mxu0
        %v771 = vadd.f32 0.0, %v770
        %v772 = vpop.f32.mrb[0].mxu0
        %773 = vmatprep.mubr.bf16.mxu0 0
        %774 = vmatmul.mubr.bf16.gmra.mrb[0].mxu0 %v591
        %v775 = vpop.f32.mrb[0].mxu0
        %v776 = vadd.f32 0.0, %v775
        %v777 = vpop.f32.mrb[0].mxu0
        %v778 = vpop.f32.mrb[0].mxu0
        %v779 = vadd.f32 0.0, %v778
        %v780 = vpop.f32.mrb[0].mxu0
        %781 = vmatprep.mubr.bf16.mxu0 0
        %782 = vmatmul.mubr.bf16.gmra.mrb[0].mxu0 %v592
        %v783 = vpop.f32.mrb[0].mxu0
        %v784 = vadd.f32 0.0, %v783
        %v785 = vpop.f32.mrb[0].mxu0
        %v786 = vpop.f32.mrb[0].mxu0
        %v787 = vadd.f32 0.0, %v786
        %v788 = vpop.f32.mrb[0].mxu0
        %789 = vmatprep.mubr.bf16.mxu0 0
        %790 = vmatmul.mubr.bf16.gmra.mrb[0].mxu0 %v593
        %v791 = vpop.f32.mrb[0].mxu0
        %v792 = vadd.f32 0.0, %v791
        %v793 = vpop.f32.mrb[0].mxu0
        %v794 = vpop.f32.mrb[0].mxu0
        %v795 = vadd.f32 0.0, %v794
        %v796 = vpop.f32.mrb[0].mxu0
        %797 = vmatprep.mubr.bf16.mxu0 0
        %798 = vmatmul.mubr.bf16.gmra.mrb[0].mxu0 %v594
        %v799 = vpop.f32.mrb[0].mxu0
        %v800 = vadd.f32 0.0, %v799
        %v801 = vpop.f32.mrb[0].mxu0
        %v802 = vpop.f32.mrb[0].mxu0
        %v803 = vadd.f32 0.0, %v802
        %v804 = vpop.f32.mrb[0].mxu0
        %805 = vmatprep.mubr.bf16.mxu0 0
        %806 = vmatmul.mubr.bf16.gmra.mrb[0].mxu0 %v595
        %v807 = vpop.f32.mrb[0].mxu0
        %v808 = vadd.f32 0.0, %v807
        %v809 = vpop.f32.mrb[0].mxu0
        %v810 = vpop.f32.mrb[0].mxu0
        %v811 = vadd.f32 0.0, %v810
        %v812 = vpop.f32.mrb[0].mxu0
        %813 = vmatprep.mubr.bf16.mxu0 0
        %814 = vmatmul.mubr.bf16.gmra.mrb[0].mxu0 %v596
        %v815 = vpop.f32.mrb[0].mxu0
        %v816 = vadd.f32 0.0, %v815
        %v817 = vpop.f32.mrb[0].mxu0
        %v818 = vpop.f32.mrb[0].mxu0
        %v819 = vadd.f32 0.0, %v818
        %v820 = vpop.f32.mrb[0].mxu0
        %821 = vdwg.mxu0
        %v822 = vpack.c.bf16 %v699, %v696
        %v823 = vpack.c.bf16 %v707, %v704
        %v824 = vpack.c.bf16 %v715, %v712
        %v825 = vpack.c.bf16 %v723, %v720
        %v826 = vpack.c.bf16 %v731, %v728
        %v827 = vpack.c.bf16 %v739, %v736
        %v828 = vpack.c.bf16 %v747, %v744
        %v829 = vpack.c.bf16 %v755, %v752
        %v830 = vpack.c.bf16 %v763, %v760
        %v831 = vpack.c.bf16 %v771, %v768
        %v832 = vpack.c.bf16 %v779, %v776
        %v833 = vpack.c.bf16 %v787, %v784
        %v834 = vpack.c.bf16 %v795, %v792
        %v835 = vpack.c.bf16 %v803, %v800
        %v836 = vpack.c.bf16 %v811, %v808
        %v837 = vpack.c.bf16 %v819, %v816
        %v870 = vunpack.c.l.b16 %v437
        %v871 = vunpack.c.h.b16 %v437
        %v872 = vunpack.c.l.b16 %v438
        %v873 = vunpack.c.h.b16 %v438
        %v874 = vunpack.c.l.b16 %v439
        %v875 = vunpack.c.h.b16 %v439
        %v876 = vunpack.c.l.b16 %v440
        %v877 = vunpack.c.h.b16 %v440
        %v878 = vunpack.c.l.b16 %v441
        %v879 = vunpack.c.h.b16 %v441
        %v880 = vunpack.c.l.b16 %v442
        %v881 = vunpack.c.h.b16 %v442
        %v882 = vunpack.c.l.b16 %v443
        %v883 = vunpack.c.h.b16 %v443
        %v884 = vunpack.c.l.b16 %v444
        %v885 = vunpack.c.h.b16 %v444
        %v886 = vunpack.c.l.b16 %v445
        %v887 = vunpack.c.h.b16 %v445
        %v888 = vunpack.c.l.b16 %v446
        %v889 = vunpack.c.h.b16 %v446
        %v890 = vunpack.c.l.b16 %v447
        %v891 = vunpack.c.h.b16 %v447
        %v892 = vunpack.c.l.b16 %v448
        %v893 = vunpack.c.h.b16 %v448
        %v894 = vunpack.c.l.b16 %v449
        %v895 = vunpack.c.h.b16 %v449
        %v896 = vunpack.c.l.b16 %v450
        %v897 = vunpack.c.h.b16 %v450
        %v898 = vunpack.c.l.b16 %v451
        %v899 = vunpack.c.h.b16 %v451
        %v900 = vunpack.c.l.b16 %v452
        %v901 = vunpack.c.h.b16 %v452
        %v902 = vunpack.c.l.b16 %v453
        %v903 = vunpack.c.h.b16 %v453
        %v904 = vunpack.c.l.b16 %v454
        %v905 = vunpack.c.h.b16 %v454
        %v906 = vunpack.c.l.b16 %v455
        %v907 = vunpack.c.h.b16 %v455
        %v908 = vunpack.c.l.b16 %v456
        %v909 = vunpack.c.h.b16 %v456
        %v910 = vunpack.c.l.b16 %v457
        %v911 = vunpack.c.h.b16 %v457
        %v912 = vunpack.c.l.b16 %v458
        %v913 = vunpack.c.h.b16 %v458
        %v914 = vunpack.c.l.b16 %v459
        %v915 = vunpack.c.h.b16 %v459
        %v916 = vunpack.c.l.b16 %v460
        %v917 = vunpack.c.h.b16 %v460
        %v918 = vunpack.c.l.b16 %v461
        %v919 = vunpack.c.h.b16 %v461
        %v920 = vunpack.c.l.b16 %v462
        %v921 = vunpack.c.h.b16 %v462
        %v922 = vunpack.c.l.b16 %v463
        %v923 = vunpack.c.h.b16 %v463
        %v924 = vunpack.c.l.b16 %v464
        %v925 = vunpack.c.h.b16 %v464
        %v926 = vunpack.c.l.b16 %v465
        %v927 = vunpack.c.h.b16 %v465
        %v928 = vunpack.c.l.b16 %v466
        %v929 = vunpack.c.h.b16 %v466
        %v930 = vunpack.c.l.b16 %v467
        %v931 = vunpack.c.h.b16 %v467
        %v932 = vunpack.c.l.b16 %v468
        %v933 = vunpack.c.h.b16 %v468
        %v934 = vpack.c.b16 %v872, %v870
        %v935 = vpack.c.b16 %v873, %v871
        %v936 = vpack.c.b16 %v876, %v874
        %v937 = vpack.c.b16 %v877, %v875
        %v938 = vpack.c.b16 %v880, %v878
        %v939 = vpack.c.b16 %v881, %v879
        %v940 = vpack.c.b16 %v884, %v882
        %v941 = vpack.c.b16 %v885, %v883
        %v942 = vpack.c.b16 %v888, %v886
        %v943 = vpack.c.b16 %v889, %v887
        %v944 = vpack.c.b16 %v892, %v890
        %v945 = vpack.c.b16 %v893, %v891
        %v946 = vpack.c.b16 %v896, %v894
        %v947 = vpack.c.b16 %v897, %v895
        %v948 = vpack.c.b16 %v900, %v898
        %v949 = vpack.c.b16 %v901, %v899
        %v950 = vpack.c.b16 %v904, %v902
        %v951 = vpack.c.b16 %v905, %v903
        %v952 = vpack.c.b16 %v908, %v906
        %v953 = vpack.c.b16 %v909, %v907
        %v954 = vpack.c.b16 %v912, %v910
        %v955 = vpack.c.b16 %v913, %v911
        %v956 = vpack.c.b16 %v916, %v914
        %v957 = vpack.c.b16 %v917, %v915
        %v958 = vpack.c.b16 %v920, %v918
        %v959 = vpack.c.b16 %v921, %v919
        %v960 = vpack.c.b16 %v924, %v922
        %v961 = vpack.c.b16 %v925, %v923
        %v962 = vpack.c.b16 %v928, %v926
        %v963 = vpack.c.b16 %v929, %v927
        %v964 = vpack.c.b16 %v932, %v930
        %v965 = vpack.c.b16 %v933, %v931
        %998 = vmatprep.subr.bf16.mxu0 0
        %999 = vmatpush1.bf16.msra.mxu0 %v822
        %1000 = vmatprep.subr.bf16.mxu0 0
        %1001 = vmatpush1.bf16.msra.mxu0 %v823
        %1002 = vmatprep.subr.bf16.mxu0 0
        %1003 = vmatpush1.bf16.msra.mxu0 %v824
        %1004 = vmatprep.subr.bf16.mxu0 0
        %1005 = vmatpush1.bf16.msra.mxu0 %v825
        %1006 = vmatprep.subr.bf16.mxu0 0
        %1007 = vmatpush1.bf16.msra.mxu0 %v826
        %1008 = vmatprep.subr.bf16.mxu0 0
        %1009 = vmatpush1.bf16.msra.mxu0 %v827
        %1010 = vmatprep.subr.bf16.mxu0 0
        %1011 = vmatpush1.bf16.msra.mxu0 %v828
        %1012 = vmatprep.subr.bf16.mxu0 0
        %1013 = vmatpush1.bf16.msra.mxu0 %v829
        %1014 = vmatprep.subr.bf16.mxu0 0
        %1015 = vmatpush1.bf16.msra.mxu0 %v830
        %1016 = vmatprep.subr.bf16.mxu0 0
        %1017 = vmatpush1.bf16.msra.mxu0 %v831
        %1018 = vmatprep.subr.bf16.mxu0 0
        %1019 = vmatpush1.bf16.msra.mxu0 %v832
        %1020 = vmatprep.subr.bf16.mxu0 0
        %1021 = vmatpush1.bf16.msra.mxu0 %v833
        %1022 = vmatprep.subr.bf16.mxu0 0
        %1023 = vmatpush1.bf16.msra.mxu0 %v834
        %1024 = vmatprep.subr.bf16.mxu0 0
        %1025 = vmatpush1.bf16.msra.mxu0 %v835
        %1026 = vmatprep.subr.bf16.mxu0 0
        %1027 = vmatpush1.bf16.msra.mxu0 %v836
        %1028 = vmatprep.subr.bf16.mxu0 0
        %1029 = vmatpush1.bf16.msra.mxu0 %v837
        %1030 = vmatprep.mubr.bf16.mxu0 %v935
        %1031 = vmatmul.mubr.bf16.gmra.mrb[0].mxu0 %v934
        %v1032 = vpop.f32.mrb[0].mxu0
        %v1033 = vadd.f32 0.0, %v1032
        %v1034 = vpop.f32.mrb[0].mxu0
        %v1035 = vpop.f32.mrb[0].mxu0
        %v1036 = vadd.f32 0.0, %v1035
        %v1037 = vpop.f32.mrb[0].mxu0
        %1038 = vmatprep.mubr.bf16.mxu0 %v937
        %1039 = vmatmul.mubr.bf16.gmra.mrb[0].mxu0 %v936
        %v1040 = vpop.f32.mrb[0].mxu0
        %v1041 = vadd.f32 0.0, %v1040
        %v1042 = vpop.f32.mrb[0].mxu0
        %v1043 = vpop.f32.mrb[0].mxu0
        %v1044 = vadd.f32 0.0, %v1043
        %v1045 = vpop.f32.mrb[0].mxu0
        %1046 = vmatprep.mubr.bf16.mxu0 %v939
        %1047 = vmatmul.mubr.bf16.gmra.mrb[0].mxu0 %v938
        %v1048 = vpop.f32.mrb[0].mxu0
        %v1049 = vadd.f32 0.0, %v1048
        %v1050 = vpop.f32.mrb[0].mxu0
        %v1051 = vpop.f32.mrb[0].mxu0
        %v1052 = vadd.f32 0.0, %v1051
        %v1053 = vpop.f32.mrb[0].mxu0
        %1054 = vmatprep.mubr.bf16.mxu0 %v941
        %1055 = vmatmul.mubr.bf16.gmra.mrb[0].mxu0 %v940
        %v1056 = vpop.f32.mrb[0].mxu0
        %v1057 = vadd.f32 0.0, %v1056
        %v1058 = vpop.f32.mrb[0].mxu0
        %v1059 = vpop.f32.mrb[0].mxu0
        %v1060 = vadd.f32 0.0, %v1059
        %v1061 = vpop.f32.mrb[0].mxu0
        %1062 = vmatprep.mubr.bf16.mxu0 %v943
        %1063 = vmatmul.mubr.bf16.gmra.mrb[0].mxu0 %v942
        %v1064 = vpop.f32.mrb[0].mxu0
        %v1065 = vadd.f32 0.0, %v1064
        %v1066 = vpop.f32.mrb[0].mxu0
        %v1067 = vpop.f32.mrb[0].mxu0
        %v1068 = vadd.f32 0.0, %v1067
        %v1069 = vpop.f32.mrb[0].mxu0
        %1070 = vmatprep.mubr.bf16.mxu0 %v945
        %1071 = vmatmul.mubr.bf16.gmra.mrb[0].mxu0 %v944
        %v1072 = vpop.f32.mrb[0].mxu0
        %v1073 = vadd.f32 0.0, %v1072
        %v1074 = vpop.f32.mrb[0].mxu0
        %v1075 = vpop.f32.mrb[0].mxu0
        %v1076 = vadd.f32 0.0, %v1075
        %v1077 = vpop.f32.mrb[0].mxu0
        %1078 = vmatprep.mubr.bf16.mxu0 %v947
        %1079 = vmatmul.mubr.bf16.gmra.mrb[0].mxu0 %v946
        %v1080 = vpop.f32.mrb[0].mxu0
        %v1081 = vadd.f32 0.0, %v1080
        %v1082 = vpop.f32.mrb[0].mxu0
        %v1083 = vpop.f32.mrb[0].mxu0
        %v1084 = vadd.f32 0.0, %v1083
        %v1085 = vpop.f32.mrb[0].mxu0
        %1086 = vmatprep.mubr.bf16.mxu0 %v949
        %1087 = vmatmul.mubr.bf16.gmra.mrb[0].mxu0 %v948
        %v1088 = vpop.f32.mrb[0].mxu0
        %v1089 = vadd.f32 0.0, %v1088
        %v1090 = vpop.f32.mrb[0].mxu0
        %v1091 = vpop.f32.mrb[0].mxu0
        %v1092 = vadd.f32 0.0, %v1091
        %v1093 = vpop.f32.mrb[0].mxu0
        %1094 = vmatprep.mubr.bf16.mxu0 %v951
        %1095 = vmatmul.mubr.bf16.gmra.mrb[0].mxu0 %v950
        %v1096 = vpop.f32.mrb[0].mxu0
        %v1097 = vadd.f32 0.0, %v1096
        %v1098 = vpop.f32.mrb[0].mxu0
        %v1099 = vpop.f32.mrb[0].mxu0
        %v1100 = vadd.f32 0.0, %v1099
        %v1101 = vpop.f32.mrb[0].mxu0
        %1102 = vmatprep.mubr.bf16.mxu0 %v953
        %1103 = vmatmul.mubr.bf16.gmra.mrb[0].mxu0 %v952
        %v1104 = vpop.f32.mrb[0].mxu0
        %v1105 = vadd.f32 0.0, %v1104
        %v1106 = vpop.f32.mrb[0].mxu0
        %v1107 = vpop.f32.mrb[0].mxu0
        %v1108 = vadd.f32 0.0, %v1107
        %v1109 = vpop.f32.mrb[0].mxu0
        %1110 = vmatprep.mubr.bf16.mxu0 %v955
        %1111 = vmatmul.mubr.bf16.gmra.mrb[0].mxu0 %v954
        %v1112 = vpop.f32.mrb[0].mxu0
        %v1113 = vadd.f32 0.0, %v1112
        %v1114 = vpop.f32.mrb[0].mxu0
        %v1115 = vpop.f32.mrb[0].mxu0
        %v1116 = vadd.f32 0.0, %v1115
        %v1117 = vpop.f32.mrb[0].mxu0
        %1118 = vmatprep.mubr.bf16.mxu0 %v957
        %1119 = vmatmul.mubr.bf16.gmra.mrb[0].mxu0 %v956
        %v1120 = vpop.f32.mrb[0].mxu0
        %v1121 = vadd.f32 0.0, %v1120
        %v1122 = vpop.f32.mrb[0].mxu0
        %v1123 = vpop.f32.mrb[0].mxu0
        %v1124 = vadd.f32 0.0, %v1123
        %v1125 = vpop.f32.mrb[0].mxu0
        %1126 = vmatprep.mubr.bf16.mxu0 %v959
        %1127 = vmatmul.mubr.bf16.gmra.mrb[0].mxu0 %v958
        %v1128 = vpop.f32.mrb[0].mxu0
        %v1129 = vadd.f32 0.0, %v1128
        %v1130 = vpop.f32.mrb[0].mxu0
        %v1131 = vpop.f32.mrb[0].mxu0
        %v1132 = vadd.f32 0.0, %v1131
        %v1133 = vpop.f32.mrb[0].mxu0
        %1134 = vmatprep.mubr.bf16.mxu0 %v961
        %1135 = vmatmul.mubr.bf16.gmra.mrb[0].mxu0 %v960
        %v1136 = vpop.f32.mrb[0].mxu0
        %v1137 = vadd.f32 0.0, %v1136
        %v1138 = vpop.f32.mrb[0].mxu0
        %v1139 = vpop.f32.mrb[0].mxu0
        %v1140 = vadd.f32 0.0, %v1139
        %v1141 = vpop.f32.mrb[0].mxu0
        %1142 = vmatprep.mubr.bf16.mxu0 %v963
        %1143 = vmatmul.mubr.bf16.gmra.mrb[0].mxu0 %v962
        %v1144 = vpop.f32.mrb[0].mxu0
        %v1145 = vadd.f32 0.0, %v1144
        %v1146 = vpop.f32.mrb[0].mxu0
        %v1147 = vpop.f32.mrb[0].mxu0
        %v1148 = vadd.f32 0.0, %v1147
        %v1149 = vpop.f32.mrb[0].mxu0
        %1150 = vmatprep.mubr.bf16.mxu0 %v965
        %1151 = vmatmul.mubr.bf16.gmra.mrb[0].mxu0 %v964
        %v1152 = vpop.f32.mrb[0].mxu0
        %v1153 = vadd.f32 0.0, %v1152
        %v1154 = vpop.f32.mrb[0].mxu0
        %v1155 = vpop.f32.mrb[0].mxu0
        %v1156 = vadd.f32 0.0, %v1155
        %v1157 = vpop.f32.mrb[0].mxu0
        %1158 = vdwg.mxu0
        %v1159 = vmax.f32 %v1033, 0.0
        %v1160 = vmax.f32 %v1036, 0.0
        %v1161 = vmax.f32 %v1041, 0.0
        %v1162 = vmax.f32 %v1044, 0.0
        %v1163 = vmax.f32 %v1049, 0.0
        %v1164 = vmax.f32 %v1052, 0.0
        %v1165 = vmax.f32 %v1057, 0.0
        %v1166 = vmax.f32 %v1060, 0.0
        %v1167 = vmax.f32 %v1065, 0.0
        %v1168 = vmax.f32 %v1068, 0.0
        %v1169 = vmax.f32 %v1073, 0.0
        %v1170 = vmax.f32 %v1076, 0.0
        %v1171 = vmax.f32 %v1081, 0.0
        %v1172 = vmax.f32 %v1084, 0.0
        %v1173 = vmax.f32 %v1089, 0.0
        %v1174 = vmax.f32 %v1092, 0.0
        %v1175 = vmax.f32 %v1097, 0.0
        %v1176 = vmax.f32 %v1100, 0.0
        %v1177 = vmax.f32 %v1105, 0.0
        %v1178 = vmax.f32 %v1108, 0.0
        %v1179 = vmax.f32 %v1113, 0.0
        %v1180 = vmax.f32 %v1116, 0.0
        %v1181 = vmax.f32 %v1121, 0.0
        %v1182 = vmax.f32 %v1124, 0.0
        %v1183 = vmax.f32 %v1129, 0.0
        %v1184 = vmax.f32 %v1132, 0.0
        %v1185 = vmax.f32 %v1137, 0.0
        %v1186 = vmax.f32 %v1140, 0.0
        %v1187 = vmax.f32 %v1145, 0.0
        %v1188 = vmax.f32 %v1148, 0.0
        %v1189 = vmax.f32 %v1153, 0.0
        %v1190 = vmax.f32 %v1156, 0.0
        %v1191 = vpack.c.bf16 %v1160, %v1159
        %v1192 = vpack.c.bf16 %v1162, %v1161
        %v1193 = vpack.c.bf16 %v1164, %v1163
        %v1194 = vpack.c.bf16 %v1166, %v1165
        %v1195 = vpack.c.bf16 %v1168, %v1167
        %v1196 = vpack.c.bf16 %v1170, %v1169
        %v1197 = vpack.c.bf16 %v1172, %v1171
        %v1198 = vpack.c.bf16 %v1174, %v1173
        %v1199 = vpack.c.bf16 %v1176, %v1175
        %v1200 = vpack.c.bf16 %v1178, %v1177
        %v1201 = vpack.c.bf16 %v1180, %v1179
        %v1202 = vpack.c.bf16 %v1182, %v1181
        %v1203 = vpack.c.bf16 %v1184, %v1183
        %v1204 = vpack.c.bf16 %v1186, %v1185
        %v1205 = vpack.c.bf16 %v1188, %v1187
        %v1206 = vpack.c.bf16 %v1190, %v1189
        %1207 = vmatprep.subr.bf16.mxu0 0
        %1208 = vmatpush1.bf16.msra.mxu0 %v1191
        %1209 = vmatprep.subr.bf16.mxu0 0
        %1210 = vmatpush1.bf16.msra.mxu0 %v1192
        %1211 = vmatprep.subr.bf16.mxu0 0
        %1212 = vmatpush1.bf16.msra.mxu0 %v1193
        %1213 = vmatprep.subr.bf16.mxu0 0
        %1214 = vmatpush1.bf16.msra.mxu0 %v1194
        %1215 = vmatprep.subr.bf16.mxu0 0
        %1216 = vmatpush1.bf16.msra.mxu0 %v1195
        %1217 = vmatprep.subr.bf16.mxu0 0
        %1218 = vmatpush1.bf16.msra.mxu0 %v1196
        %1219 = vmatprep.subr.bf16.mxu0 0
        %1220 = vmatpush1.bf16.msra.mxu0 %v1197
        %1221 = vmatprep.subr.bf16.mxu0 0
        %1222 = vmatpush1.bf16.msra.mxu0 %v1198
        %1223 = vmatprep.subr.bf16.mxu0 0
        %1224 = vmatpush1.bf16.msra.mxu0 %v1199
        %1225 = vmatprep.subr.bf16.mxu0 0
        %1226 = vmatpush1.bf16.msra.mxu0 %v1200
        %1227 = vmatprep.subr.bf16.mxu0 0
        %1228 = vmatpush1.bf16.msra.mxu0 %v1201
        %1229 = vmatprep.subr.bf16.mxu0 0
        %1230 = vmatpush1.bf16.msra.mxu0 %v1202
        %1231 = vmatprep.subr.bf16.mxu0 0
        %1232 = vmatpush1.bf16.msra.mxu0 %v1203
        %1233 = vmatprep.subr.bf16.mxu0 0
        %1234 = vmatpush1.bf16.msra.mxu0 %v1204
        %1235 = vmatprep.subr.bf16.mxu0 0
        %1236 = vmatpush1.bf16.msra.mxu0 %v1205
        %1237 = vmatprep.subr.bf16.mxu0 0
        %1238 = vmatpush1.bf16.msra.mxu0 %v1206
        %1239 = vmatprep.mubr.bf16.mxu0 %v935
        %1240 = vmatmul.mubr.bf16.gmra.mrb[0].mxu0 %v934
        %v1241 = vpop.f32.mrb[0].mxu0
        %v1242 = vadd.f32 0.0, %v1241
        %v1243 = vpop.f32.mrb[0].mxu0
        %v1244 = vpop.f32.mrb[0].mxu0
        %v1245 = vadd.f32 0.0, %v1244
        %v1246 = vpop.f32.mrb[0].mxu0
        %1247 = vmatprep.mubr.bf16.mxu0 %v937
        %1248 = vmatmul.mubr.bf16.gmra.mrb[0].mxu0 %v936
        %v1249 = vpop.f32.mrb[0].mxu0
        %v1250 = vadd.f32 0.0, %v1249
        %v1251 = vpop.f32.mrb[0].mxu0
        %v1252 = vpop.f32.mrb[0].mxu0
        %v1253 = vadd.f32 0.0, %v1252
        %v1254 = vpop.f32.mrb[0].mxu0
        %1255 = vmatprep.mubr.bf16.mxu0 %v939
        %1256 = vmatmul.mubr.bf16.gmra.mrb[0].mxu0 %v938
        %v1257 = vpop.f32.mrb[0].mxu0
        %v1258 = vadd.f32 0.0, %v1257
        %v1259 = vpop.f32.mrb[0].mxu0
        %v1260 = vpop.f32.mrb[0].mxu0
        %v1261 = vadd.f32 0.0, %v1260
        %v1262 = vpop.f32.mrb[0].mxu0
        %1263 = vmatprep.mubr.bf16.mxu0 %v941
        %1264 = vmatmul.mubr.bf16.gmra.mrb[0].mxu0 %v940
        %v1265 = vpop.f32.mrb[0].mxu0
        %v1266 = vadd.f32 0.0, %v1265
        %v1267 = vpop.f32.mrb[0].mxu0
        %v1268 = vpop.f32.mrb[0].mxu0
        %v1269 = vadd.f32 0.0, %v1268
        %v1270 = vpop.f32.mrb[0].mxu0
        %1271 = vmatprep.mubr.bf16.mxu0 %v943
        %1272 = vmatmul.mubr.bf16.gmra.mrb[0].mxu0 %v942
        %v1273 = vpop.f32.mrb[0].mxu0
        %v1274 = vadd.f32 0.0, %v1273
        %v1275 = vpop.f32.mrb[0].mxu0
        %v1276 = vpop.f32.mrb[0].mxu0
        %v1277 = vadd.f32 0.0, %v1276
        %v1278 = vpop.f32.mrb[0].mxu0
        %1279 = vmatprep.mubr.bf16.mxu0 %v945
        %1280 = vmatmul.mubr.bf16.gmra.mrb[0].mxu0 %v944
        %v1281 = vpop.f32.mrb[0].mxu0
        %v1282 = vadd.f32 0.0, %v1281
        %v1283 = vpop.f32.mrb[0].mxu0
        %v1284 = vpop.f32.mrb[0].mxu0
        %v1285 = vadd.f32 0.0, %v1284
        %v1286 = vpop.f32.mrb[0].mxu0
        %1287 = vmatprep.mubr.bf16.mxu0 %v947
        %1288 = vmatmul.mubr.bf16.gmra.mrb[0].mxu0 %v946
        %v1289 = vpop.f32.mrb[0].mxu0
        %v1290 = vadd.f32 0.0, %v1289
        %v1291 = vpop.f32.mrb[0].mxu0
        %v1292 = vpop.f32.mrb[0].mxu0
        %v1293 = vadd.f32 0.0, %v1292
        %v1294 = vpop.f32.mrb[0].mxu0
        %1295 = vmatprep.mubr.bf16.mxu0 %v949
        %1296 = vmatmul.mubr.bf16.gmra.mrb[0].mxu0 %v948
        %v1297 = vpop.f32.mrb[0].mxu0
        %v1298 = vadd.f32 0.0, %v1297
        %v1299 = vpop.f32.mrb[0].mxu0
        %v1300 = vpop.f32.mrb[0].mxu0
        %v1301 = vadd.f32 0.0, %v1300
        %v1302 = vpop.f32.mrb[0].mxu0
        %1303 = vmatprep.mubr.bf16.mxu0 %v951
        %1304 = vmatmul.mubr.bf16.gmra.mrb[0].mxu0 %v950
        %v1305 = vpop.f32.mrb[0].mxu0
        %v1306 = vadd.f32 0.0, %v1305
        %v1307 = vpop.f32.mrb[0].mxu0
        %v1308 = vpop.f32.mrb[0].mxu0
        %v1309 = vadd.f32 0.0, %v1308
        %v1310 = vpop.f32.mrb[0].mxu0
        %1311 = vmatprep.mubr.bf16.mxu0 %v953
        %1312 = vmatmul.mubr.bf16.gmra.mrb[0].mxu0 %v952
        %v1313 = vpop.f32.mrb[0].mxu0
        %v1314 = vadd.f32 0.0, %v1313
        %v1315 = vpop.f32.mrb[0].mxu0
        %v1316 = vpop.f32.mrb[0].mxu0
        %v1317 = vadd.f32 0.0, %v1316
        %v1318 = vpop.f32.mrb[0].mxu0
        %1319 = vmatprep.mubr.bf16.mxu0 %v955
        %1320 = vmatmul.mubr.bf16.gmra.mrb[0].mxu0 %v954
        %v1321 = vpop.f32.mrb[0].mxu0
        %v1322 = vadd.f32 0.0, %v1321
        %v1323 = vpop.f32.mrb[0].mxu0
        %v1324 = vpop.f32.mrb[0].mxu0
        %v1325 = vadd.f32 0.0, %v1324
        %v1326 = vpop.f32.mrb[0].mxu0
        %1327 = vmatprep.mubr.bf16.mxu0 %v957
        %1328 = vmatmul.mubr.bf16.gmra.mrb[0].mxu0 %v956
        %v1329 = vpop.f32.mrb[0].mxu0
        %v1330 = vadd.f32 0.0, %v1329
        %v1331 = vpop.f32.mrb[0].mxu0
        %v1332 = vpop.f32.mrb[0].mxu0
        %v1333 = vadd.f32 0.0, %v1332
        %v1334 = vpop.f32.mrb[0].mxu0
        %1335 = vmatprep.mubr.bf16.mxu0 %v959
        %1336 = vmatmul.mubr.bf16.gmra.mrb[0].mxu0 %v958
        %v1337 = vpop.f32.mrb[0].mxu0
        %v1338 = vadd.f32 0.0, %v1337
        %v1339 = vpop.f32.mrb[0].mxu0
        %v1340 = vpop.f32.mrb[0].mxu0
        %v1341 = vadd.f32 0.0, %v1340
        %v1342 = vpop.f32.mrb[0].mxu0
        %1343 = vmatprep.mubr.bf16.mxu0 %v961
        %1344 = vmatmul.mubr.bf16.gmra.mrb[0].mxu0 %v960
        %v1345 = vpop.f32.mrb[0].mxu0
        %v1346 = vadd.f32 0.0, %v1345
        %v1347 = vpop.f32.mrb[0].mxu0
        %v1348 = vpop.f32.mrb[0].mxu0
        %v1349 = vadd.f32 0.0, %v1348
        %v1350 = vpop.f32.mrb[0].mxu0
        %1351 = vmatprep.mubr.bf16.mxu0 %v963
        %1352 = vmatmul.mubr.bf16.gmra.mrb[0].mxu0 %v962
        %v1353 = vpop.f32.mrb[0].mxu0
        %v1354 = vadd.f32 0.0, %v1353
        %v1355 = vpop.f32.mrb[0].mxu0
        %v1356 = vpop.f32.mrb[0].mxu0
        %v1357 = vadd.f32 0.0, %v1356
        %v1358 = vpop.f32.mrb[0].mxu0
        %1359 = vmatprep.mubr.bf16.mxu0 %v965
        %1360 = vmatmul.mubr.bf16.gmra.mrb[0].mxu0 %v964
        %v1361 = vpop.f32.mrb[0].mxu0
        %v1362 = vadd.f32 0.0, %v1361
        %v1363 = vpop.f32.mrb[0].mxu0
        %v1364 = vpop.f32.mrb[0].mxu0
        %v1365 = vadd.f32 0.0, %v1364
        %v1366 = vpop.f32.mrb[0].mxu0
        %1367 = vdwg.mxu0
        %v1368 = vpack.c.bf16 %v1245, %v1242
        %v1369 = vpack.c.bf16 %v1253, %v1250
        %v1370 = vpack.c.bf16 %v1261, %v1258
        %v1371 = vpack.c.bf16 %v1269, %v1266
        %v1372 = vpack.c.bf16 %v1277, %v1274
        %v1373 = vpack.c.bf16 %v1285, %v1282
        %v1374 = vpack.c.bf16 %v1293, %v1290
        %v1375 = vpack.c.bf16 %v1301, %v1298
        %v1376 = vpack.c.bf16 %v1309, %v1306
        %v1377 = vpack.c.bf16 %v1317, %v1314
        %v1378 = vpack.c.bf16 %v1325, %v1322
        %v1379 = vpack.c.bf16 %v1333, %v1330
        %v1380 = vpack.c.bf16 %v1341, %v1338
        %v1381 = vpack.c.bf16 %v1349, %v1346
        %v1382 = vpack.c.bf16 %v1357, %v1354
        %v1383 = vpack.c.bf16 %v1365, %v1362
        %v1384 = vld [vmem:[#allocation9] sm:$0xf]
        %v1385 = vld [vmem:[#allocation9 + $0x4] sm:$0xf]
        %v1386 = vld [vmem:[#allocation9 + $0x8] sm:$0xf]
        %v1387 = vld [vmem:[#allocation9 + $0xc] sm:$0xf]
        %v1388 = vld [vmem:[#allocation9 + $0x10] sm:$0xf]
        %v1389 = vld [vmem:[#allocation9 + $0x14] sm:$0xf]
        %v1390 = vld [vmem:[#allocation9 + $0x18] sm:$0xf]
        %v1391 = vld [vmem:[#allocation9 + $0x1c] sm:$0xf]
        %v1392 = vld [vmem:[#allocation9 + $0x20] sm:$0xf]
        %v1393 = vld [vmem:[#allocation9 + $0x24] sm:$0xf]
        %v1394 = vld [vmem:[#allocation9 + $0x28] sm:$0xf]
        %v1395 = vld [vmem:[#allocation9 + $0x2c] sm:$0xf]
        %v1396 = vld [vmem:[#allocation9 + $0x30] sm:$0xf]
        %v1397 = vld [vmem:[#allocation9 + $0x34] sm:$0xf]
        %v1398 = vld [vmem:[#allocation9 + $0x38] sm:$0xf]
        %v1399 = vld [vmem:[#allocation9 + $0x3c] sm:$0xf]
        %v1416 = vunpack.c.l.b16 %v1384
        %v1417 = vunpack.c.l.b16 %v1385
        %v1418 = vunpack.c.l.b16 %v1386
        %v1419 = vunpack.c.l.b16 %v1387
        %v1420 = vunpack.c.l.b16 %v1388
        %v1421 = vunpack.c.l.b16 %v1389
        %v1422 = vunpack.c.l.b16 %v1390
        %v1423 = vunpack.c.l.b16 %v1391
        %v1424 = vunpack.c.l.b16 %v1392
        %v1425 = vunpack.c.l.b16 %v1393
        %v1426 = vunpack.c.l.b16 %v1394
        %v1427 = vunpack.c.l.b16 %v1395
        %v1428 = vunpack.c.l.b16 %v1396
        %v1429 = vunpack.c.l.b16 %v1397
        %v1430 = vunpack.c.l.b16 %v1398
        %v1431 = vunpack.c.l.b16 %v1399
        %v1432 = vpack.c.b16 %v1417, %v1416
        %v1433 = vpack.c.b16 %v1419, %v1418
        %v1434 = vpack.c.b16 %v1421, %v1420
        %v1435 = vpack.c.b16 %v1423, %v1422
        %v1436 = vpack.c.b16 %v1425, %v1424
        %v1437 = vpack.c.b16 %v1427, %v1426
        %v1438 = vpack.c.b16 %v1429, %v1428
        %v1439 = vpack.c.b16 %v1431, %v1430
        %1448 = vmatprep.subr.bf16.mxu0 0
        %1449 = vmatpush1.bf16.msra.mxu0 %v1432
        %1450 = vmatprep.subr.bf16.mxu0 0
        %1451 = vmatpush1.bf16.msra.mxu0 %v1433
        %1452 = vmatprep.subr.bf16.mxu0 0
        %1453 = vmatpush1.bf16.msra.mxu0 %v1434
        %1454 = vmatprep.subr.bf16.mxu0 0
        %1455 = vmatpush1.bf16.msra.mxu0 %v1435
        %1456 = vmatprep.subr.bf16.mxu0 0
        %1457 = vmatpush1.bf16.msra.mxu0 %v1436
        %1458 = vmatprep.subr.bf16.mxu0 0
        %1459 = vmatpush1.bf16.msra.mxu0 %v1437
        %1460 = vmatprep.subr.bf16.mxu0 0
        %1461 = vmatpush1.bf16.msra.mxu0 %v1438
        %1462 = vmatprep.subr.bf16.mxu0 0
        %1463 = vmatpush1.bf16.msra.mxu0 %v1439
        %1464 = vmatprep.subr.bf16.mxu0 0
        %1465 = vmatpush1.bf16.msra.mxu0 0
        %1466 = vmatprep.subr.bf16.mxu0 0
        %1467 = vmatpush1.bf16.msra.mxu0 0
        %1468 = vmatprep.subr.bf16.mxu0 0
        %1469 = vmatpush1.bf16.msra.mxu0 0
        %1470 = vmatprep.subr.bf16.mxu0 0
        %1471 = vmatpush1.bf16.msra.mxu0 0
        %1472 = vmatprep.subr.bf16.mxu0 0
        %1473 = vmatpush1.bf16.msra.mxu0 0
        %1474 = vmatprep.subr.bf16.mxu0 0
        %1475 = vmatpush1.bf16.msra.mxu0 0
        %1476 = vmatprep.subr.bf16.mxu0 0
        %1477 = vmatpush1.bf16.msra.mxu0 0
        %1478 = vmatprep.subr.bf16.mxu0 0
        %1479 = vmatpush1.bf16.msra.mxu0 0
        %1480 = vmatprep.mubr.bf16.mxu0 0
        %1481 = vmatmul.mubr.bf16.gmra.mrb[0].mxu0 %v1368
        %v1482 = vpop.f32.mrb[0].mxu0
        %v1483 = vadd.f32 0.0, %v1482
        %v1484 = vpop.f32.mrb[0].mxu0
        %v1485 = vpop.f32.mrb[0].mxu0
        %v1486 = vadd.f32 0.0, %v1485
        %v1487 = vpop.f32.mrb[0].mxu0
        %1488 = vmatprep.mubr.bf16.mxu0 0
        %1489 = vmatmul.mubr.bf16.gmra.mrb[0].mxu0 %v1369
        %v1490 = vpop.f32.mrb[0].mxu0
        %v1491 = vadd.f32 0.0, %v1490
        %v1492 = vpop.f32.mrb[0].mxu0
        %v1493 = vpop.f32.mrb[0].mxu0
        %v1494 = vadd.f32 0.0, %v1493
        %v1495 = vpop.f32.mrb[0].mxu0
        %1496 = vmatprep.mubr.bf16.mxu0 0
        %1497 = vmatmul.mubr.bf16.gmra.mrb[0].mxu0 %v1370
        %v1498 = vpop.f32.mrb[0].mxu0
        %v1499 = vadd.f32 0.0, %v1498
        %v1500 = vpop.f32.mrb[0].mxu0
        %v1501 = vpop.f32.mrb[0].mxu0
        %v1502 = vadd.f32 0.0, %v1501
        %v1503 = vpop.f32.mrb[0].mxu0
        %1504 = vmatprep.mubr.bf16.mxu0 0
        %1505 = vmatmul.mubr.bf16.gmra.mrb[0].mxu0 %v1371
        %v1506 = vpop.f32.mrb[0].mxu0
        %v1507 = vadd.f32 0.0, %v1506
        %v1508 = vpop.f32.mrb[0].mxu0
        %v1509 = vpop.f32.mrb[0].mxu0
        %v1510 = vadd.f32 0.0, %v1509
        %v1511 = vpop.f32.mrb[0].mxu0
        %1512 = vmatprep.mubr.bf16.mxu0 0
        %1513 = vmatmul.mubr.bf16.gmra.mrb[0].mxu0 %v1372
        %v1514 = vpop.f32.mrb[0].mxu0
        %v1515 = vadd.f32 0.0, %v1514
        %v1516 = vpop.f32.mrb[0].mxu0
        %v1517 = vpop.f32.mrb[0].mxu0
        %v1518 = vadd.f32 0.0, %v1517
        %v1519 = vpop.f32.mrb[0].mxu0
        %1520 = vmatprep.mubr.bf16.mxu0 0
        %1521 = vmatmul.mubr.bf16.gmra.mrb[0].mxu0 %v1373
        %v1522 = vpop.f32.mrb[0].mxu0
        %v1523 = vadd.f32 0.0, %v1522
        %v1524 = vpop.f32.mrb[0].mxu0
        %v1525 = vpop.f32.mrb[0].mxu0
        %v1526 = vadd.f32 0.0, %v1525
        %v1527 = vpop.f32.mrb[0].mxu0
        %1528 = vmatprep.mubr.bf16.mxu0 0
        %1529 = vmatmul.mubr.bf16.gmra.mrb[0].mxu0 %v1374
        %v1530 = vpop.f32.mrb[0].mxu0
        %v1531 = vadd.f32 0.0, %v1530
        %v1532 = vpop.f32.mrb[0].mxu0
        %v1533 = vpop.f32.mrb[0].mxu0
        %v1534 = vadd.f32 0.0, %v1533
        %v1535 = vpop.f32.mrb[0].mxu0
        %1536 = vmatprep.mubr.bf16.mxu0 0
        %1537 = vmatmul.mubr.bf16.gmra.mrb[0].mxu0 %v1375
        %v1538 = vpop.f32.mrb[0].mxu0
        %v1539 = vadd.f32 0.0, %v1538
        %v1540 = vpop.f32.mrb[0].mxu0
        %v1541 = vpop.f32.mrb[0].mxu0
        %v1542 = vadd.f32 0.0, %v1541
        %v1543 = vpop.f32.mrb[0].mxu0
        %1544 = vmatprep.mubr.bf16.mxu0 0
        %1545 = vmatmul.mubr.bf16.gmra.mrb[0].mxu0 %v1376
        %v1546 = vpop.f32.mrb[0].mxu0
        %v1547 = vadd.f32 0.0, %v1546
        %v1548 = vpop.f32.mrb[0].mxu0
        %v1549 = vpop.f32.mrb[0].mxu0
        %v1550 = vadd.f32 0.0, %v1549
        %v1551 = vpop.f32.mrb[0].mxu0
        %1552 = vmatprep.mubr.bf16.mxu0 0
        %1553 = vmatmul.mubr.bf16.gmra.mrb[0].mxu0 %v1377
        %v1554 = vpop.f32.mrb[0].mxu0
        %v1555 = vadd.f32 0.0, %v1554
        %v1556 = vpop.f32.mrb[0].mxu0
        %v1557 = vpop.f32.mrb[0].mxu0
        %v1558 = vadd.f32 0.0, %v1557
        %v1559 = vpop.f32.mrb[0].mxu0
        %1560 = vmatprep.mubr.bf16.mxu0 0
        %1561 = vmatmul.mubr.bf16.gmra.mrb[0].mxu0 %v1378
        %v1562 = vpop.f32.mrb[0].mxu0
        %v1563 = vadd.f32 0.0, %v1562
        %v1564 = vpop.f32.mrb[0].mxu0
        %v1565 = vpop.f32.mrb[0].mxu0
        %v1566 = vadd.f32 0.0, %v1565
        %v1567 = vpop.f32.mrb[0].mxu0
        %1568 = vmatprep.mubr.bf16.mxu0 0
        %1569 = vmatmul.mubr.bf16.gmra.mrb[0].mxu0 %v1379
        %v1570 = vpop.f32.mrb[0].mxu0
        %v1571 = vadd.f32 0.0, %v1570
        %v1572 = vpop.f32.mrb[0].mxu0
        %v1573 = vpop.f32.mrb[0].mxu0
        %v1574 = vadd.f32 0.0, %v1573
        %v1575 = vpop.f32.mrb[0].mxu0
        %1576 = vmatprep.mubr.bf16.mxu0 0
        %1577 = vmatmul.mubr.bf16.gmra.mrb[0].mxu0 %v1380
        %v1578 = vpop.f32.mrb[0].mxu0
        %v1579 = vadd.f32 0.0, %v1578
        %v1580 = vpop.f32.mrb[0].mxu0
        %v1581 = vpop.f32.mrb[0].mxu0
        %v1582 = vadd.f32 0.0, %v1581
        %v1583 = vpop.f32.mrb[0].mxu0
        %1584 = vmatprep.mubr.bf16.mxu0 0
        %1585 = vmatmul.mubr.bf16.gmra.mrb[0].mxu0 %v1381
        %v1586 = vpop.f32.mrb[0].mxu0
        %v1587 = vadd.f32 0.0, %v1586
        %v1588 = vpop.f32.mrb[0].mxu0
        %v1589 = vpop.f32.mrb[0].mxu0
        %v1590 = vadd.f32 0.0, %v1589
        %v1591 = vpop.f32.mrb[0].mxu0
        %1592 = vmatprep.mubr.bf16.mxu0 0
        %1593 = vmatmul.mubr.bf16.gmra.mrb[0].mxu0 %v1382
        %v1594 = vpop.f32.mrb[0].mxu0
        %v1595 = vadd.f32 0.0, %v1594
        %v1596 = vpop.f32.mrb[0].mxu0
        %v1597 = vpop.f32.mrb[0].mxu0
        %v1598 = vadd.f32 0.0, %v1597
        %v1599 = vpop.f32.mrb[0].mxu0
        %1600 = vmatprep.mubr.bf16.mxu0 0
        %1601 = vmatmul.mubr.bf16.gmra.mrb[0].mxu0 %v1383
        %v1602 = vpop.f32.mrb[0].mxu0
        %v1603 = vadd.f32 0.0, %v1602
        %v1604 = vpop.f32.mrb[0].mxu0
        %v1605 = vpop.f32.mrb[0].mxu0
        %v1606 = vadd.f32 0.0, %v1605
        %v1607 = vpop.f32.mrb[0].mxu0
        %1608 = vdwg.mxu0
        %v1609 = vmax.f32 %v1483, 0.0
        %v1610 = vmax.f32 %v1486, 0.0
        %v1611 = vmax.f32 %v1491, 0.0
        %v1612 = vmax.f32 %v1494, 0.0
        %v1613 = vmax.f32 %v1499, 0.0
        %v1614 = vmax.f32 %v1502, 0.0
        %v1615 = vmax.f32 %v1507, 0.0
        %v1616 = vmax.f32 %v1510, 0.0
        %v1617 = vmax.f32 %v1515, 0.0
        %v1618 = vmax.f32 %v1518, 0.0
        %v1619 = vmax.f32 %v1523, 0.0
        %v1620 = vmax.f32 %v1526, 0.0
        %v1621 = vmax.f32 %v1531, 0.0
        %v1622 = vmax.f32 %v1534, 0.0
        %v1623 = vmax.f32 %v1539, 0.0
        %v1624 = vmax.f32 %v1542, 0.0
        %v1625 = vmax.f32 %v1547, 0.0
        %v1626 = vmax.f32 %v1550, 0.0
        %v1627 = vmax.f32 %v1555, 0.0
        %v1628 = vmax.f32 %v1558, 0.0
        %v1629 = vmax.f32 %v1563, 0.0
        %v1630 = vmax.f32 %v1566, 0.0
        %v1631 = vmax.f32 %v1571, 0.0
        %v1632 = vmax.f32 %v1574, 0.0
        %v1633 = vmax.f32 %v1579, 0.0
        %v1634 = vmax.f32 %v1582, 0.0
        %v1635 = vmax.f32 %v1587, 0.0
        %v1636 = vmax.f32 %v1590, 0.0
        %v1637 = vmax.f32 %v1595, 0.0
        %v1638 = vmax.f32 %v1598, 0.0
        %v1639 = vmax.f32 %v1603, 0.0
        %v1640 = vmax.f32 %v1606, 0.0
        %v1641 = vadd.f32 %v1159, %v1609
        %v1642 = vadd.f32 %v1160, %v1610
        %v1643 = vadd.f32 %v1161, %v1611
        %v1644 = vadd.f32 %v1162, %v1612
        %v1645 = vadd.f32 %v1163, %v1613
        %v1646 = vadd.f32 %v1164, %v1614
        %v1647 = vadd.f32 %v1165, %v1615
        %v1648 = vadd.f32 %v1166, %v1616
        %v1649 = vadd.f32 %v1167, %v1617
        %v1650 = vadd.f32 %v1168, %v1618
        %v1651 = vadd.f32 %v1169, %v1619
        %v1652 = vadd.f32 %v1170, %v1620
        %v1653 = vadd.f32 %v1171, %v1621
        %v1654 = vadd.f32 %v1172, %v1622
        %v1655 = vadd.f32 %v1173, %v1623
        %v1656 = vadd.f32 %v1174, %v1624
        %v1657 = vadd.f32 %v1175, %v1625
        %v1658 = vadd.f32 %v1176, %v1626
        %v1659 = vadd.f32 %v1177, %v1627
        %v1660 = vadd.f32 %v1178, %v1628
        %v1661 = vadd.f32 %v1179, %v1629
        %v1662 = vadd.f32 %v1180, %v1630
        %v1663 = vadd.f32 %v1181, %v1631
        %v1664 = vadd.f32 %v1182, %v1632
        %v1665 = vadd.f32 %v1183, %v1633
        %v1666 = vadd.f32 %v1184, %v1634
        %v1667 = vadd.f32 %v1185, %v1635
        %v1668 = vadd.f32 %v1186, %v1636
        %v1669 = vadd.f32 %v1187, %v1637
        %v1670 = vadd.f32 %v1188, %v1638
        %v1671 = vadd.f32 %v1189, %v1639
        %v1672 = vadd.f32 %v1190, %v1640
        %v1673 = vpack.c.bf16 %v1642, %v1641
        %v1674 = vpack.c.bf16 %v1644, %v1643
        %v1675 = vpack.c.bf16 %v1646, %v1645
        %v1676 = vpack.c.bf16 %v1648, %v1647
        %v1677 = vpack.c.bf16 %v1650, %v1649
        %v1678 = vpack.c.bf16 %v1652, %v1651
        %v1679 = vpack.c.bf16 %v1654, %v1653
        %v1680 = vpack.c.bf16 %v1656, %v1655
        %v1681 = vpack.c.bf16 %v1658, %v1657
        %v1682 = vpack.c.bf16 %v1660, %v1659
        %v1683 = vpack.c.bf16 %v1662, %v1661
        %v1684 = vpack.c.bf16 %v1664, %v1663
        %v1685 = vpack.c.bf16 %v1666, %v1665
        %v1686 = vpack.c.bf16 %v1668, %v1667
        %v1687 = vpack.c.bf16 %v1670, %v1669
        %v1688 = vpack.c.bf16 %v1672, %v1671
        %1689 = vmatprep.subr.bf16.mxu0 0
        %1690 = vmatpush1.bf16.msra.mxu0 %v1673
        %1691 = vmatprep.subr.bf16.mxu0 0
        %1692 = vmatpush1.bf16.msra.mxu0 %v1674
        %1693 = vmatprep.subr.bf16.mxu0 0
        %1694 = vmatpush1.bf16.msra.mxu0 %v1675
        %1695 = vmatprep.subr.bf16.mxu0 0
        %1696 = vmatpush1.bf16.msra.mxu0 %v1676
        %1697 = vmatprep.subr.bf16.mxu0 0
        %1698 = vmatpush1.bf16.msra.mxu0 %v1677
        %1699 = vmatprep.subr.bf16.mxu0 0
        %1700 = vmatpush1.bf16.msra.mxu0 %v1678
        %1701 = vmatprep.subr.bf16.mxu0 0
        %1702 = vmatpush1.bf16.msra.mxu0 %v1679
        %1703 = vmatprep.subr.bf16.mxu0 0
        %1704 = vmatpush1.bf16.msra.mxu0 %v1680
        %1705 = vmatprep.subr.bf16.mxu0 0
        %1706 = vmatpush1.bf16.msra.mxu0 %v1681
        %1707 = vmatprep.subr.bf16.mxu0 0
        %1708 = vmatpush1.bf16.msra.mxu0 %v1682
        %1709 = vmatprep.subr.bf16.mxu0 0
        %1710 = vmatpush1.bf16.msra.mxu0 %v1683
        %1711 = vmatprep.subr.bf16.mxu0 0
        %1712 = vmatpush1.bf16.msra.mxu0 %v1684
        %1713 = vmatprep.subr.bf16.mxu0 0
        %1714 = vmatpush1.bf16.msra.mxu0 %v1685
        %1715 = vmatprep.subr.bf16.mxu0 0
        %1716 = vmatpush1.bf16.msra.mxu0 %v1686
        %1717 = vmatprep.subr.bf16.mxu0 0
        %1718 = vmatpush1.bf16.msra.mxu0 %v1687
        %1719 = vmatprep.subr.bf16.mxu0 0
        %1720 = vmatpush1.bf16.msra.mxu0 %v1688
        %1721 = vmatprep.mubr.bf16.mxu0 %v935
        %1722 = vmatmul.mubr.bf16.gmra.mrb[0].mxu0 %v934
        %v1723 = vpop.f32.mrb[0].mxu0
        %v1724 = vadd.f32 0.0, %v1723
        %v1725 = vpop.f32.mrb[0].mxu0
        %v1726 = vpop.f32.mrb[0].mxu0
        %v1727 = vadd.f32 0.0, %v1726
        %v1728 = vpop.f32.mrb[0].mxu0
        %1729 = vmatprep.mubr.bf16.mxu0 %v937
        %1730 = vmatmul.mubr.bf16.gmra.mrb[0].mxu0 %v936
        %v1731 = vpop.f32.mrb[0].mxu0
        %v1732 = vadd.f32 0.0, %v1731
        %v1733 = vpop.f32.mrb[0].mxu0
        %v1734 = vpop.f32.mrb[0].mxu0
        %v1735 = vadd.f32 0.0, %v1734
        %v1736 = vpop.f32.mrb[0].mxu0
        %1737 = vmatprep.mubr.bf16.mxu0 %v939
        %1738 = vmatmul.mubr.bf16.gmra.mrb[0].mxu0 %v938
        %v1739 = vpop.f32.mrb[0].mxu0
        %v1740 = vadd.f32 0.0, %v1739
        %v1741 = vpop.f32.mrb[0].mxu0
        %v1742 = vpop.f32.mrb[0].mxu0
        %v1743 = vadd.f32 0.0, %v1742
        %v1744 = vpop.f32.mrb[0].mxu0
        %1745 = vmatprep.mubr.bf16.mxu0 %v941
        %1746 = vmatmul.mubr.bf16.gmra.mrb[0].mxu0 %v940
        %v1747 = vpop.f32.mrb[0].mxu0
        %v1748 = vadd.f32 0.0, %v1747
        %v1749 = vpop.f32.mrb[0].mxu0
        %v1750 = vpop.f32.mrb[0].mxu0
        %v1751 = vadd.f32 0.0, %v1750
        %v1752 = vpop.f32.mrb[0].mxu0
        %1753 = vmatprep.mubr.bf16.mxu0 %v943
        %1754 = vmatmul.mubr.bf16.gmra.mrb[0].mxu0 %v942
        %v1755 = vpop.f32.mrb[0].mxu0
        %v1756 = vadd.f32 0.0, %v1755
        %v1757 = vpop.f32.mrb[0].mxu0
        %v1758 = vpop.f32.mrb[0].mxu0
        %v1759 = vadd.f32 0.0, %v1758
        %v1760 = vpop.f32.mrb[0].mxu0
        %1761 = vmatprep.mubr.bf16.mxu0 %v945
        %1762 = vmatmul.mubr.bf16.gmra.mrb[0].mxu0 %v944
        %v1763 = vpop.f32.mrb[0].mxu0
        %v1764 = vadd.f32 0.0, %v1763
        %v1765 = vpop.f32.mrb[0].mxu0
        %v1766 = vpop.f32.mrb[0].mxu0
        %v1767 = vadd.f32 0.0, %v1766
        %v1768 = vpop.f32.mrb[0].mxu0
        %1769 = vmatprep.mubr.bf16.mxu0 %v947
        %1770 = vmatmul.mubr.bf16.gmra.mrb[0].mxu0 %v946
        %v1771 = vpop.f32.mrb[0].mxu0
        %v1772 = vadd.f32 0.0, %v1771
        %v1773 = vpop.f32.mrb[0].mxu0
        %v1774 = vpop.f32.mrb[0].mxu0
        %v1775 = vadd.f32 0.0, %v1774
        %v1776 = vpop.f32.mrb[0].mxu0
        %1777 = vmatprep.mubr.bf16.mxu0 %v949
        %1778 = vmatmul.mubr.bf16.gmra.mrb[0].mxu0 %v948
        %v1779 = vpop.f32.mrb[0].mxu0
        %v1780 = vadd.f32 0.0, %v1779
        %v1781 = vpop.f32.mrb[0].mxu0
        %v1782 = vpop.f32.mrb[0].mxu0
        %v1783 = vadd.f32 0.0, %v1782
        %v1784 = vpop.f32.mrb[0].mxu0
        %1785 = vmatprep.mubr.bf16.mxu0 %v951
        %1786 = vmatmul.mubr.bf16.gmra.mrb[0].mxu0 %v950
        %v1787 = vpop.f32.mrb[0].mxu0
        %v1788 = vadd.f32 0.0, %v1787
        %v1789 = vpop.f32.mrb[0].mxu0
        %v1790 = vpop.f32.mrb[0].mxu0
        %v1791 = vadd.f32 0.0, %v1790
        %v1792 = vpop.f32.mrb[0].mxu0
        %1793 = vmatprep.mubr.bf16.mxu0 %v953
        %1794 = vmatmul.mubr.bf16.gmra.mrb[0].mxu0 %v952
        %v1795 = vpop.f32.mrb[0].mxu0
        %v1796 = vadd.f32 0.0, %v1795
        %v1797 = vpop.f32.mrb[0].mxu0
        %v1798 = vpop.f32.mrb[0].mxu0
        %v1799 = vadd.f32 0.0, %v1798
        %v1800 = vpop.f32.mrb[0].mxu0
        %1801 = vmatprep.mubr.bf16.mxu0 %v955
        %1802 = vmatmul.mubr.bf16.gmra.mrb[0].mxu0 %v954
        %v1803 = vpop.f32.mrb[0].mxu0
        %v1804 = vadd.f32 0.0, %v1803
        %v1805 = vpop.f32.mrb[0].mxu0
        %v1806 = vpop.f32.mrb[0].mxu0
        %v1807 = vadd.f32 0.0, %v1806
        %v1808 = vpop.f32.mrb[0].mxu0
        %1809 = vmatprep.mubr.bf16.mxu0 %v957
        %1810 = vmatmul.mubr.bf16.gmra.mrb[0].mxu0 %v956
        %v1811 = vpop.f32.mrb[0].mxu0
        %v1812 = vadd.f32 0.0, %v1811
        %v1813 = vpop.f32.mrb[0].mxu0
        %v1814 = vpop.f32.mrb[0].mxu0
        %v1815 = vadd.f32 0.0, %v1814
        %v1816 = vpop.f32.mrb[0].mxu0
        %1817 = vmatprep.mubr.bf16.mxu0 %v959
        %1818 = vmatmul.mubr.bf16.gmra.mrb[0].mxu0 %v958
        %v1819 = vpop.f32.mrb[0].mxu0
        %v1820 = vadd.f32 0.0, %v1819
        %v1821 = vpop.f32.mrb[0].mxu0
        %v1822 = vpop.f32.mrb[0].mxu0
        %v1823 = vadd.f32 0.0, %v1822
        %v1824 = vpop.f32.mrb[0].mxu0
        %1825 = vmatprep.mubr.bf16.mxu0 %v961
        %1826 = vmatmul.mubr.bf16.gmra.mrb[0].mxu0 %v960
        %v1827 = vpop.f32.mrb[0].mxu0
        %v1828 = vadd.f32 0.0, %v1827
        %v1829 = vpop.f32.mrb[0].mxu0
        %v1830 = vpop.f32.mrb[0].mxu0
        %v1831 = vadd.f32 0.0, %v1830
        %v1832 = vpop.f32.mrb[0].mxu0
        %1833 = vmatprep.mubr.bf16.mxu0 %v963
        %1834 = vmatmul.mubr.bf16.gmra.mrb[0].mxu0 %v962
        %v1835 = vpop.f32.mrb[0].mxu0
        %v1836 = vadd.f32 0.0, %v1835
        %v1837 = vpop.f32.mrb[0].mxu0
        %v1838 = vpop.f32.mrb[0].mxu0
        %v1839 = vadd.f32 0.0, %v1838
        %v1840 = vpop.f32.mrb[0].mxu0
        %1841 = vmatprep.mubr.bf16.mxu0 %v965
        %1842 = vmatmul.mubr.bf16.gmra.mrb[0].mxu0 %v964
        %v1843 = vpop.f32.mrb[0].mxu0
        %v1844 = vadd.f32 0.0, %v1843
        %v1845 = vpop.f32.mrb[0].mxu0
        %v1846 = vpop.f32.mrb[0].mxu0
        %v1847 = vadd.f32 0.0, %v1846
        %v1848 = vpop.f32.mrb[0].mxu0
        %1849 = vdwg.mxu0
        %v1850 = vpack.c.bf16 %v1727, %v1724
        %v1851 = vpack.c.bf16 %v1735, %v1732
        %v1852 = vpack.c.bf16 %v1743, %v1740
        %v1853 = vpack.c.bf16 %v1751, %v1748
        %v1854 = vpack.c.bf16 %v1759, %v1756
        %v1855 = vpack.c.bf16 %v1767, %v1764
        %v1856 = vpack.c.bf16 %v1775, %v1772
        %v1857 = vpack.c.bf16 %v1783, %v1780
        %v1858 = vpack.c.bf16 %v1791, %v1788
        %v1859 = vpack.c.bf16 %v1799, %v1796
        %v1860 = vpack.c.bf16 %v1807, %v1804
        %v1861 = vpack.c.bf16 %v1815, %v1812
        %v1862 = vpack.c.bf16 %v1823, %v1820
        %v1863 = vpack.c.bf16 %v1831, %v1828
        %v1864 = vpack.c.bf16 %v1839, %v1836
        %v1865 = vpack.c.bf16 %v1847, %v1844
        %v1866 = vld [vmem:[#allocation10] sm:$0xf]
        %v1867 = vld [vmem:[#allocation10 + $0x4] sm:$0xf]
        %v1868 = vld [vmem:[#allocation10 + $0x8] sm:$0xf]
        %v1869 = vld [vmem:[#allocation10 + $0xc] sm:$0xf]
        %v1870 = vld [vmem:[#allocation10 + $0x10] sm:$0xf]
        %v1871 = vld [vmem:[#allocation10 + $0x14] sm:$0xf]
        %v1872 = vld [vmem:[#allocation10 + $0x18] sm:$0xf]
        %v1873 = vld [vmem:[#allocation10 + $0x1c] sm:$0xf]
        %v1874 = vld [vmem:[#allocation10 + $0x20] sm:$0xf]
        %v1875 = vld [vmem:[#allocation10 + $0x24] sm:$0xf]
        %v1876 = vld [vmem:[#allocation10 + $0x28] sm:$0xf]
        %v1877 = vld [vmem:[#allocation10 + $0x2c] sm:$0xf]
        %v1878 = vld [vmem:[#allocation10 + $0x30] sm:$0xf]
        %v1879 = vld [vmem:[#allocation10 + $0x34] sm:$0xf]
        %v1880 = vld [vmem:[#allocation10 + $0x38] sm:$0xf]
        %v1881 = vld [vmem:[#allocation10 + $0x3c] sm:$0xf]
        %v1898 = vunpack.c.l.b16 %v1866
        %v1899 = vunpack.c.l.b16 %v1867
        %v1900 = vunpack.c.l.b16 %v1868
        %v1901 = vunpack.c.l.b16 %v1869
        %v1902 = vunpack.c.l.b16 %v1870
        %v1903 = vunpack.c.l.b16 %v1871
        %v1904 = vunpack.c.l.b16 %v1872
        %v1905 = vunpack.c.l.b16 %v1873
        %v1906 = vunpack.c.l.b16 %v1874
        %v1907 = vunpack.c.l.b16 %v1875
        %v1908 = vunpack.c.l.b16 %v1876
        %v1909 = vunpack.c.l.b16 %v1877
        %v1910 = vunpack.c.l.b16 %v1878
        %v1911 = vunpack.c.l.b16 %v1879
        %v1912 = vunpack.c.l.b16 %v1880
        %v1913 = vunpack.c.l.b16 %v1881
        %v1914 = vpack.c.b16 %v1899, %v1898
        %v1915 = vpack.c.b16 %v1901, %v1900
        %v1916 = vpack.c.b16 %v1903, %v1902
        %v1917 = vpack.c.b16 %v1905, %v1904
        %v1918 = vpack.c.b16 %v1907, %v1906
        %v1919 = vpack.c.b16 %v1909, %v1908
        %v1920 = vpack.c.b16 %v1911, %v1910
        %v1921 = vpack.c.b16 %v1913, %v1912
        %1930 = vmatprep.subr.bf16.mxu0 0
        %1931 = vmatpush1.bf16.msra.mxu0 %v1914
        %1932 = vmatprep.subr.bf16.mxu0 0
        %1933 = vmatpush1.bf16.msra.mxu0 %v1915
        %1934 = vmatprep.subr.bf16.mxu0 0
        %1935 = vmatpush1.bf16.msra.mxu0 %v1916
        %1936 = vmatprep.subr.bf16.mxu0 0
        %1937 = vmatpush1.bf16.msra.mxu0 %v1917
        %1938 = vmatprep.subr.bf16.mxu0 0
        %1939 = vmatpush1.bf16.msra.mxu0 %v1918
        %1940 = vmatprep.subr.bf16.mxu0 0
        %1941 = vmatpush1.bf16.msra.mxu0 %v1919
        %1942 = vmatprep.subr.bf16.mxu0 0
        %1943 = vmatpush1.bf16.msra.mxu0 %v1920
        %1944 = vmatprep.subr.bf16.mxu0 0
        %1945 = vmatpush1.bf16.msra.mxu0 %v1921
        %1946 = vmatprep.subr.bf16.mxu0 0
        %1947 = vmatpush1.bf16.msra.mxu0 0
        %1948 = vmatprep.subr.bf16.mxu0 0
        %1949 = vmatpush1.bf16.msra.mxu0 0
        %1950 = vmatprep.subr.bf16.mxu0 0
        %1951 = vmatpush1.bf16.msra.mxu0 0
        %1952 = vmatprep.subr.bf16.mxu0 0
        %1953 = vmatpush1.bf16.msra.mxu0 0
        %1954 = vmatprep.subr.bf16.mxu0 0
        %1955 = vmatpush1.bf16.msra.mxu0 0
        %1956 = vmatprep.subr.bf16.mxu0 0
        %1957 = vmatpush1.bf16.msra.mxu0 0
        %1958 = vmatprep.subr.bf16.mxu0 0
        %1959 = vmatpush1.bf16.msra.mxu0 0
        %1960 = vmatprep.subr.bf16.mxu0 0
        %1961 = vmatpush1.bf16.msra.mxu0 0
        %1962 = vmatprep.mubr.bf16.mxu0 0
        %1963 = vmatmul.mubr.bf16.gmra.mrb[0].mxu0 %v1850
        %v1964 = vpop.f32.mrb[0].mxu0
        %v1965 = vadd.f32 0.0, %v1964
        %v1966 = vpop.f32.mrb[0].mxu0
        %v1967 = vpop.f32.mrb[0].mxu0
        %v1968 = vadd.f32 0.0, %v1967
        %v1969 = vpop.f32.mrb[0].mxu0
        %1970 = vmatprep.mubr.bf16.mxu0 0
        %1971 = vmatmul.mubr.bf16.gmra.mrb[0].mxu0 %v1851
        %v1972 = vpop.f32.mrb[0].mxu0
        %v1973 = vadd.f32 0.0, %v1972
        %v1974 = vpop.f32.mrb[0].mxu0
        %v1975 = vpop.f32.mrb[0].mxu0
        %v1976 = vadd.f32 0.0, %v1975
        %v1977 = vpop.f32.mrb[0].mxu0
        %1978 = vmatprep.mubr.bf16.mxu0 0
        %1979 = vmatmul.mubr.bf16.gmra.mrb[0].mxu0 %v1852
        %v1980 = vpop.f32.mrb[0].mxu0
        %v1981 = vadd.f32 0.0, %v1980
        %v1982 = vpop.f32.mrb[0].mxu0
        %v1983 = vpop.f32.mrb[0].mxu0
        %v1984 = vadd.f32 0.0, %v1983
        %v1985 = vpop.f32.mrb[0].mxu0
        %1986 = vmatprep.mubr.bf16.mxu0 0
        %1987 = vmatmul.mubr.bf16.gmra.mrb[0].mxu0 %v1853
        %v1988 = vpop.f32.mrb[0].mxu0
        %v1989 = vadd.f32 0.0, %v1988
        %v1990 = vpop.f32.mrb[0].mxu0
        %v1991 = vpop.f32.mrb[0].mxu0
        %v1992 = vadd.f32 0.0, %v1991
        %v1993 = vpop.f32.mrb[0].mxu0
        %1994 = vmatprep.mubr.bf16.mxu0 0
        %1995 = vmatmul.mubr.bf16.gmra.mrb[0].mxu0 %v1854
        %v1996 = vpop.f32.mrb[0].mxu0
        %v1997 = vadd.f32 0.0, %v1996
        %v1998 = vpop.f32.mrb[0].mxu0
        %v1999 = vpop.f32.mrb[0].mxu0
        %v2000 = vadd.f32 0.0, %v1999
        %v2001 = vpop.f32.mrb[0].mxu0
        %2002 = vmatprep.mubr.bf16.mxu0 0
        %2003 = vmatmul.mubr.bf16.gmra.mrb[0].mxu0 %v1855
        %v2004 = vpop.f32.mrb[0].mxu0
        %v2005 = vadd.f32 0.0, %v2004
        %v2006 = vpop.f32.mrb[0].mxu0
        %v2007 = vpop.f32.mrb[0].mxu0
        %v2008 = vadd.f32 0.0, %v2007
        %v2009 = vpop.f32.mrb[0].mxu0
        %2010 = vmatprep.mubr.bf16.mxu0 0
        %2011 = vmatmul.mubr.bf16.gmra.mrb[0].mxu0 %v1856
        %v2012 = vpop.f32.mrb[0].mxu0
        %v2013 = vadd.f32 0.0, %v2012
        %v2014 = vpop.f32.mrb[0].mxu0
        %v2015 = vpop.f32.mrb[0].mxu0
        %v2016 = vadd.f32 0.0, %v2015
        %v2017 = vpop.f32.mrb[0].mxu0
        %2018 = vmatprep.mubr.bf16.mxu0 0
        %2019 = vmatmul.mubr.bf16.gmra.mrb[0].mxu0 %v1857
        %v2020 = vpop.f32.mrb[0].mxu0
        %v2021 = vadd.f32 0.0, %v2020
        %v2022 = vpop.f32.mrb[0].mxu0
        %v2023 = vpop.f32.mrb[0].mxu0
        %v2024 = vadd.f32 0.0, %v2023
        %v2025 = vpop.f32.mrb[0].mxu0
        %2026 = vmatprep.mubr.bf16.mxu0 0
        %2027 = vmatmul.mubr.bf16.gmra.mrb[0].mxu0 %v1858
        %v2028 = vpop.f32.mrb[0].mxu0
        %v2029 = vadd.f32 0.0, %v2028
        %v2030 = vpop.f32.mrb[0].mxu0
        %v2031 = vpop.f32.mrb[0].mxu0
        %v2032 = vadd.f32 0.0, %v2031
        %v2033 = vpop.f32.mrb[0].mxu0
        %2034 = vmatprep.mubr.bf16.mxu0 0
        %2035 = vmatmul.mubr.bf16.gmra.mrb[0].mxu0 %v1859
        %v2036 = vpop.f32.mrb[0].mxu0
        %v2037 = vadd.f32 0.0, %v2036
        %v2038 = vpop.f32.mrb[0].mxu0
        %v2039 = vpop.f32.mrb[0].mxu0
        %v2040 = vadd.f32 0.0, %v2039
        %v2041 = vpop.f32.mrb[0].mxu0
        %2042 = vmatprep.mubr.bf16.mxu0 0
        %2043 = vmatmul.mubr.bf16.gmra.mrb[0].mxu0 %v1860
        %v2044 = vpop.f32.mrb[0].mxu0
        %v2045 = vadd.f32 0.0, %v2044
        %v2046 = vpop.f32.mrb[0].mxu0
        %v2047 = vpop.f32.mrb[0].mxu0
        %v2048 = vadd.f32 0.0, %v2047
        %v2049 = vpop.f32.mrb[0].mxu0
        %2050 = vmatprep.mubr.bf16.mxu0 0
        %2051 = vmatmul.mubr.bf16.gmra.mrb[0].mxu0 %v1861
        %v2052 = vpop.f32.mrb[0].mxu0
        %v2053 = vadd.f32 0.0, %v2052
        %v2054 = vpop.f32.mrb[0].mxu0
        %v2055 = vpop.f32.mrb[0].mxu0
        %v2056 = vadd.f32 0.0, %v2055
        %v2057 = vpop.f32.mrb[0].mxu0
        %2058 = vmatprep.mubr.bf16.mxu0 0
        %2059 = vmatmul.mubr.bf16.gmra.mrb[0].mxu0 %v1862
        %v2060 = vpop.f32.mrb[0].mxu0
        %v2061 = vadd.f32 0.0, %v2060
        %v2062 = vpop.f32.mrb[0].mxu0
        %v2063 = vpop.f32.mrb[0].mxu0
        %v2064 = vadd.f32 0.0, %v2063
        %v2065 = vpop.f32.mrb[0].mxu0
        %2066 = vmatprep.mubr.bf16.mxu0 0
        %2067 = vmatmul.mubr.bf16.gmra.mrb[0].mxu0 %v1863
        %v2068 = vpop.f32.mrb[0].mxu0
        %v2069 = vadd.f32 0.0, %v2068
        %v2070 = vpop.f32.mrb[0].mxu0
        %v2071 = vpop.f32.mrb[0].mxu0
        %v2072 = vadd.f32 0.0, %v2071
        %v2073 = vpop.f32.mrb[0].mxu0
        %2074 = vmatprep.mubr.bf16.mxu0 0
        %2075 = vmatmul.mubr.bf16.gmra.mrb[0].mxu0 %v1864
        %v2076 = vpop.f32.mrb[0].mxu0
        %v2077 = vadd.f32 0.0, %v2076
        %v2078 = vpop.f32.mrb[0].mxu0
        %v2079 = vpop.f32.mrb[0].mxu0
        %v2080 = vadd.f32 0.0, %v2079
        %v2081 = vpop.f32.mrb[0].mxu0
        %2082 = vmatprep.mubr.bf16.mxu0 0
        %2083 = vmatmul.mubr.bf16.gmra.mrb[0].mxu0 %v1865
        %v2084 = vpop.f32.mrb[0].mxu0
        %v2085 = vadd.f32 0.0, %v2084
        %v2086 = vpop.f32.mrb[0].mxu0
        %v2087 = vpop.f32.mrb[0].mxu0
        %v2088 = vadd.f32 0.0, %v2087
        %v2089 = vpop.f32.mrb[0].mxu0
        %2090 = vdwg.mxu0
        %v2091 = vmax.f32 %v1965, 0.0
        %v2092 = vmax.f32 %v1968, 0.0
        %v2093 = vmax.f32 %v1973, 0.0
        %v2094 = vmax.f32 %v1976, 0.0
        %v2095 = vmax.f32 %v1981, 0.0
        %v2096 = vmax.f32 %v1984, 0.0
        %v2097 = vmax.f32 %v1989, 0.0
        %v2098 = vmax.f32 %v1992, 0.0
        %v2099 = vmax.f32 %v1997, 0.0
        %v2100 = vmax.f32 %v2000, 0.0
        %v2101 = vmax.f32 %v2005, 0.0
        %v2102 = vmax.f32 %v2008, 0.0
        %v2103 = vmax.f32 %v2013, 0.0
        %v2104 = vmax.f32 %v2016, 0.0
        %v2105 = vmax.f32 %v2021, 0.0
        %v2106 = vmax.f32 %v2024, 0.0
        %v2107 = vmax.f32 %v2029, 0.0
        %v2108 = vmax.f32 %v2032, 0.0
        %v2109 = vmax.f32 %v2037, 0.0
        %v2110 = vmax.f32 %v2040, 0.0
        %v2111 = vmax.f32 %v2045, 0.0
        %v2112 = vmax.f32 %v2048, 0.0
        %v2113 = vmax.f32 %v2053, 0.0
        %v2114 = vmax.f32 %v2056, 0.0
        %v2115 = vmax.f32 %v2061, 0.0
        %v2116 = vmax.f32 %v2064, 0.0
        %v2117 = vmax.f32 %v2069, 0.0
        %v2118 = vmax.f32 %v2072, 0.0
        %v2119 = vmax.f32 %v2077, 0.0
        %v2120 = vmax.f32 %v2080, 0.0
        %v2121 = vmax.f32 %v2085, 0.0
        %v2122 = vmax.f32 %v2088, 0.0
        %v2123 = vadd.f32 %v1641, %v2091
        %v2124 = vadd.f32 %v1642, %v2092
        %v2125 = vadd.f32 %v1643, %v2093
        %v2126 = vadd.f32 %v1644, %v2094
        %v2127 = vadd.f32 %v1645, %v2095
        %v2128 = vadd.f32 %v1646, %v2096
        %v2129 = vadd.f32 %v1647, %v2097
        %v2130 = vadd.f32 %v1648, %v2098
        %v2131 = vadd.f32 %v1649, %v2099
        %v2132 = vadd.f32 %v1650, %v2100
        %v2133 = vadd.f32 %v1651, %v2101
        %v2134 = vadd.f32 %v1652, %v2102
        %v2135 = vadd.f32 %v1653, %v2103
        %v2136 = vadd.f32 %v1654, %v2104
        %v2137 = vadd.f32 %v1655, %v2105
        %v2138 = vadd.f32 %v1656, %v2106
        %v2139 = vadd.f32 %v1657, %v2107
        %v2140 = vadd.f32 %v1658, %v2108
        %v2141 = vadd.f32 %v1659, %v2109
        %v2142 = vadd.f32 %v1660, %v2110
        %v2143 = vadd.f32 %v1661, %v2111
        %v2144 = vadd.f32 %v1662, %v2112
        %v2145 = vadd.f32 %v1663, %v2113
        %v2146 = vadd.f32 %v1664, %v2114
        %v2147 = vadd.f32 %v1665, %v2115
        %v2148 = vadd.f32 %v1666, %v2116
        %v2149 = vadd.f32 %v1667, %v2117
        %v2150 = vadd.f32 %v1668, %v2118
        %v2151 = vadd.f32 %v1669, %v2119
        %v2152 = vadd.f32 %v1670, %v2120
        %v2153 = vadd.f32 %v1671, %v2121
        %v2154 = vadd.f32 %v1672, %v2122
        %v2155 = vpack.c.bf16 %v2124, %v2123
        %v2156 = vpack.c.bf16 %v2126, %v2125
        %v2157 = vpack.c.bf16 %v2128, %v2127
        %v2158 = vpack.c.bf16 %v2130, %v2129
        %v2159 = vpack.c.bf16 %v2132, %v2131
        %v2160 = vpack.c.bf16 %v2134, %v2133
        %v2161 = vpack.c.bf16 %v2136, %v2135
        %v2162 = vpack.c.bf16 %v2138, %v2137
        %v2163 = vpack.c.bf16 %v2140, %v2139
        %v2164 = vpack.c.bf16 %v2142, %v2141
        %v2165 = vpack.c.bf16 %v2144, %v2143
        %v2166 = vpack.c.bf16 %v2146, %v2145
        %v2167 = vpack.c.bf16 %v2148, %v2147
        %v2168 = vpack.c.bf16 %v2150, %v2149
        %v2169 = vpack.c.bf16 %v2152, %v2151
        %v2170 = vpack.c.bf16 %v2154, %v2153
        %v2187 = vunpack.c.l.b16 %v2155
        %v2188 = vunpack.c.h.b16 %v2155
        %v2189 = vunpack.c.l.b16 %v2156
        %v2190 = vunpack.c.h.b16 %v2156
        %v2191 = vunpack.c.l.b16 %v2157
        %v2192 = vunpack.c.h.b16 %v2157
        %v2193 = vunpack.c.l.b16 %v2158
        %v2194 = vunpack.c.h.b16 %v2158
        %v2195 = vunpack.c.l.b16 %v2159
        %v2196 = vunpack.c.h.b16 %v2159
        %v2197 = vunpack.c.l.b16 %v2160
        %v2198 = vunpack.c.h.b16 %v2160
        %v2199 = vunpack.c.l.b16 %v2161
        %v2200 = vunpack.c.h.b16 %v2161
        %v2201 = vunpack.c.l.b16 %v2162
        %v2202 = vunpack.c.h.b16 %v2162
        %v2203 = vunpack.c.l.b16 %v2163
        %v2204 = vunpack.c.h.b16 %v2163
        %v2205 = vunpack.c.l.b16 %v2164
        %v2206 = vunpack.c.h.b16 %v2164
        %v2207 = vunpack.c.l.b16 %v2165
        %v2208 = vunpack.c.h.b16 %v2165
        %v2209 = vunpack.c.l.b16 %v2166
        %v2210 = vunpack.c.h.b16 %v2166
        %v2211 = vunpack.c.l.b16 %v2167
        %v2212 = vunpack.c.h.b16 %v2167
        %v2213 = vunpack.c.l.b16 %v2168
        %v2214 = vunpack.c.h.b16 %v2168
        %v2215 = vunpack.c.l.b16 %v2169
        %v2216 = vunpack.c.h.b16 %v2169
        %v2217 = vunpack.c.l.b16 %v2170
        %v2218 = vunpack.c.h.b16 %v2170
        %v2219 = vpack.c.b16 %v2187, %v2187
        %v2220 = vpack.c.b16 %v2188, %v2188
        %v2221 = vpack.c.b16 %v2189, %v2189
        %v2222 = vpack.c.b16 %v2190, %v2190
        %v2223 = vpack.c.b16 %v2191, %v2191
        %v2224 = vpack.c.b16 %v2192, %v2192
        %v2225 = vpack.c.b16 %v2193, %v2193
        %v2226 = vpack.c.b16 %v2194, %v2194
        %v2227 = vpack.c.b16 %v2195, %v2195
        %v2228 = vpack.c.b16 %v2196, %v2196
        %v2229 = vpack.c.b16 %v2197, %v2197
        %v2230 = vpack.c.b16 %v2198, %v2198
        %v2231 = vpack.c.b16 %v2199, %v2199
        %v2232 = vpack.c.b16 %v2200, %v2200
        %v2233 = vpack.c.b16 %v2201, %v2201
        %v2234 = vpack.c.b16 %v2202, %v2202
        %v2235 = vpack.c.b16 %v2203, %v2203
        %v2236 = vpack.c.b16 %v2204, %v2204
        %v2237 = vpack.c.b16 %v2205, %v2205
        %v2238 = vpack.c.b16 %v2206, %v2206
        %v2239 = vpack.c.b16 %v2207, %v2207
        %v2240 = vpack.c.b16 %v2208, %v2208
        %v2241 = vpack.c.b16 %v2209, %v2209
        %v2242 = vpack.c.b16 %v2210, %v2210
        %v2243 = vpack.c.b16 %v2211, %v2211
        %v2244 = vpack.c.b16 %v2212, %v2212
        %v2245 = vpack.c.b16 %v2213, %v2213
        %v2246 = vpack.c.b16 %v2214, %v2214
        %v2247 = vpack.c.b16 %v2215, %v2215
        %v2248 = vpack.c.b16 %v2216, %v2216
        %v2249 = vpack.c.b16 %v2217, %v2217
        %v2250 = vpack.c.b16 %v2218, %v2218
        %2283 = vst [vmem:[%s428] sm:$0xf] %v2219
        %2284 = vst [vmem:[%s428 + $0x4] sm:$0xf] %v2220
        %2285 = vst [vmem:[%s428 + $0x8] sm:$0xf] %v2221
        %2286 = vst [vmem:[%s428 + $0xc] sm:$0xf] %v2222
        %2287 = vst [vmem:[%s428 + $0x10] sm:$0xf] %v2223
        %2288 = vst [vmem:[%s428 + $0x14] sm:$0xf] %v2224
        %2289 = vst [vmem:[%s428 + $0x18] sm:$0xf] %v2225
        %2290 = vst [vmem:[%s428 + $0x1c] sm:$0xf] %v2226
        %2291 = vst [vmem:[%s428 + $0x20] sm:$0xf] %v2227
        %2292 = vst [vmem:[%s428 + $0x24] sm:$0xf] %v2228
        %2293 = vst [vmem:[%s428 + $0x28] sm:$0xf] %v2229
        %2294 = vst [vmem:[%s428 + $0x2c] sm:$0xf] %v2230
        %2295 = vst [vmem:[%s428 + $0x30] sm:$0xf] %v2231
        %2296 = vst [vmem:[%s428 + $0x34] sm:$0xf] %v2232
        %2297 = vst [vmem:[%s428 + $0x38] sm:$0xf] %v2233
        %2298 = vst [vmem:[%s428 + $0x3c] sm:$0xf] %v2234
        %2299 = vst [vmem:[%s428 + $0x40] sm:$0xf] %v2235
        %2300 = vst [vmem:[%s428 + $0x44] sm:$0xf] %v2236
        %2301 = vst [vmem:[%s428 + $0x48] sm:$0xf] %v2237
        %2302 = vst [vmem:[%s428 + $0x4c] sm:$0xf] %v2238
        %2303 = vst [vmem:[%s428 + $0x50] sm:$0xf] %v2239
        %2304 = vst [vmem:[%s428 + $0x54] sm:$0xf] %v2240
        %2305 = vst [vmem:[%s428 + $0x58] sm:$0xf] %v2241
        %2306 = vst [vmem:[%s428 + $0x5c] sm:$0xf] %v2242
        %2307 = vst [vmem:[%s428 + $0x60] sm:$0xf] %v2243
        %2308 = vst [vmem:[%s428 + $0x64] sm:$0xf] %v2244
        %2309 = vst [vmem:[%s428 + $0x68] sm:$0xf] %v2245
        %2310 = vst [vmem:[%s428 + $0x6c] sm:$0xf] %v2246
        %2311 = vst [vmem:[%s428 + $0x70] sm:$0xf] %v2247
        %2312 = vst [vmem:[%s428 + $0x74] sm:$0xf] %v2248
        %2313 = vst [vmem:[%s428 + $0x78] sm:$0xf] %v2249
        %2314 = vst [vmem:[%s428 + $0x7c] sm:$0xf] %v2250
        %v2315 = vld [vmem:[%s365] sm:$0xff]
        %v2316 = vld [vmem:[%s365 + $0x8] sm:$0xff]
        %v2319 = vunpack.c.l.b16 %v2315
        %v2320 = vunpack.c.h.b16 %v2315
        %v2321 = vunpack.c.l.b16 %v2316
        %v2322 = vunpack.c.h.b16 %v2316
        %v2323 = vpack.c.b16 %v2321, %v2319
        %v2324 = vpack.c.b16 %v2322, %v2320
        %2327 = vmatprep.subr.bf16.mxu0 0
        %2328 = vmatpush1.bf16.msra.mxu0 %v2155
        %2329 = vmatprep.subr.bf16.mxu0 0
        %2330 = vmatpush1.bf16.msra.mxu0 %v2156
        %2331 = vmatprep.subr.bf16.mxu0 0
        %2332 = vmatpush1.bf16.msra.mxu0 %v2157
        %2333 = vmatprep.subr.bf16.mxu0 0
        %2334 = vmatpush1.bf16.msra.mxu0 %v2158
        %2335 = vmatprep.subr.bf16.mxu0 0
        %2336 = vmatpush1.bf16.msra.mxu0 %v2159
        %2337 = vmatprep.subr.bf16.mxu0 0
        %2338 = vmatpush1.bf16.msra.mxu0 %v2160
        %2339 = vmatprep.subr.bf16.mxu0 0
        %2340 = vmatpush1.bf16.msra.mxu0 %v2161
        %2341 = vmatprep.subr.bf16.mxu0 0
        %2342 = vmatpush1.bf16.msra.mxu0 %v2162
        %2343 = vmatprep.subr.bf16.mxu0 0
        %2344 = vmatpush1.bf16.msra.mxu0 %v2163
        %2345 = vmatprep.subr.bf16.mxu0 0
        %2346 = vmatpush1.bf16.msra.mxu0 %v2164
        %2347 = vmatprep.subr.bf16.mxu0 0
        %2348 = vmatpush1.bf16.msra.mxu0 %v2165
        %2349 = vmatprep.subr.bf16.mxu0 0
        %2350 = vmatpush1.bf16.msra.mxu0 %v2166
        %2351 = vmatprep.subr.bf16.mxu0 0
        %2352 = vmatpush1.bf16.msra.mxu0 %v2167
        %2353 = vmatprep.subr.bf16.mxu0 0
        %2354 = vmatpush1.bf16.msra.mxu0 %v2168
        %2355 = vmatprep.subr.bf16.mxu0 0
        %2356 = vmatpush1.bf16.msra.mxu0 %v2169
        %2357 = vmatprep.subr.bf16.mxu0 0
        %2358 = vmatpush1.bf16.msra.mxu0 %v2170
        %2359 = vmatprep.mubr.bf16.mxu0 %v2324
        %2360 = vmatmul.mubr.bf16.gmra.mrb[0].mxu0 %v2323
        %v2361 = vpop.f32.mrb[0].mxu0
        %v2362 = vadd.f32 0.0, %v2361
        %v2363 = vpop.f32.mrb[0].mxu0
        %v2364 = vpop.f32.mrb[0].mxu0
        %v2365 = vadd.f32 0.0, %v2364
        %v2366 = vpop.f32.mrb[0].mxu0
        %2367 = vdwg.mxu0
        %2368 = vst [vmem:[%s434] sm:$0xff] %v2362
        %2369 = vst [vmem:[%s434 + $0x8] sm:$0xff] %v2365
        %s2370 = smul.u32 32, %s27
        %p2371 = scmp.lt.s32.totalorder %s2370, 127
        %s2372 = scalar_select %p2371, %s2370, 127
        %s2373 = smul.addr %s2372, 4
        %s2374 = scalar_lea.vmem %s6, %s2373
        %s2375 = smul.u32 2, %s27
        %p2376 = scmp.lt.s32.totalorder %s2375, 7
        %s2377 = scalar_select %p2376, %s2375, 7
        %s2378 = smul.addr %s2377, 8
        %s2379 = scalar_lea.vmem %s7, %s2378
        // Predicated region
        $region69: #{gcn_embed_mc_call.1} parent=43 // pred_check
          %p2380 = pneg %p186
        $region70: #{gcn_embed_mc_call.1} parent=43 // pred_check_branch
          %2382 = sbr.rel (%p2380) target = $region72
        $region71: #{gcn_embed_mc_call.1} parent=43 // pred_region
          %s2383 = smul.u32 32, %s27
        $region72: #{gcn_embed_mc_call.1} parent=43 // pred_fallthru
          _
        // Predicated region
        $region73: #{gcn_embed_mc_call.1} parent=43 // pred_check
          %p2384 = pneg %p212
        $region74: #{gcn_embed_mc_call.1} parent=43 // pred_check_branch
          %2386 = sbr.rel (%p2384) target = $region76
        $region75: #{gcn_embed_mc_call.1} parent=43 // pred_region
          %s2387 = smul.u32 2, %s27
        $region76: #{gcn_embed_mc_call.1} parent=43 // pred_fallthru
          _
      $region44: #{gcn_embed_mc_call.1} parent=5 // pred_fallthru
        _
      %p2388 = scmp.le.s32.totalorder 2, %s22
      // Predicated region
      $region77: #{gcn_embed_mc_call.1} parent=5 // pred_check
        %p2389 = pneg %p2388
      $region78: #{gcn_embed_mc_call.1} parent=5 // pred_check_branch
        %2391 = sbr.rel (%p2389) target = $region80
      $region79: #{gcn_embed_mc_call.1} parent=5 // pred_region
        %s2392 = ssub.s32 %s22, 2
        // Predicated region
        $region81: #{gcn_embed_mc_call.1} parent=79 // pred_check
          %p2393 = pneg %p192
        $region82: #{gcn_embed_mc_call.1} parent=79 // pred_check_branch
          %2395 = sbr.rel (%p2393) target = $region84
        $region83: #{gcn_embed_mc_call.1} parent=79 // pred_region
          %s2396 = smul.u32 32, %s28
          %p2397 = scmp.lt.s32.totalorder %s2396, 127
          %s2398 = scalar_select %p2397, %s2396, 127
          %s2399 = smul.addr %s2398, 4
          %s2400 = scalar_lea.vmem %s6, %s2399
        $region84: #{gcn_embed_mc_call.1} parent=79 // pred_fallthru
          _
        // Predicated region
        $region85: #{gcn_embed_mc_call.1} parent=79 // pred_check
          %p2401 = pneg %p218
        $region86: #{gcn_embed_mc_call.1} parent=79 // pred_check_branch
          %2403 = sbr.rel (%p2401) target = $region88
        $region87: #{gcn_embed_mc_call.1} parent=79 // pred_region
          %s2404 = smul.u32 2, %s28
          %p2405 = scmp.lt.s32.totalorder %s2404, 7
          %s2406 = scalar_select %p2405, %s2404, 7
          %s2407 = smul.addr %s2406, 8
          %s2408 = scalar_lea.vmem %s7, %s2407
        $region88: #{gcn_embed_mc_call.1} parent=79 // pred_fallthru
          _
      $region80: #{gcn_embed_mc_call.1} parent=5 // pred_fallthru
        _
    $region6: #{gcn_embed_mc_call.1} parent=1 // loop_footer
      %s26 = sadd.s32 1, %s22
    $region7: #{gcn_embed_mc_call.1} parent=1 // loop_footer_branch
      %21 = sbr.rel target = $region3
    $region8: #{gcn_embed_mc_call.1} parent=1 // loop_exit
      _
    %2409 = vsyncpa [#allocation3], 1
    %s2410 = scalar_lea.sflag [#allocation3], 1
    %2411 = vsyncpa %s2410, 1
    %2412 = vsyncpa [#allocation5], 1
    %s2413 = scalar_lea.sflag [#allocation5], 1
    %2414 = vsyncpa %s2413, 1
    %2415 = vsyncpa [#allocation8], 1
    %2416 = vsyncpa [#allocation11], 1

</llo_original>
